<compile_context>
chip_gen: v5e
topology: v5e:2x2
jax: 0.10.0
libtpu: 0.0.40
codegen_flags: <defaults>
</compile_context>

<pallas_src>
import jax
import jax.numpy as jnp
from jax.experimental import pallas as pl
from jax.experimental.pallas import tpu as pltpu

ALPHA, BETA, THETA, V0 = 0.3, 0.0, 0.5, 0.0   # LIF soma params ('all_share')
BN_EPS = 1e-5
LANE = 128
BIG = 1e30                                     # threshold for padded channels


def _round_up(n, m):
    return ((n + m - 1) // m) * m


# ------------------------------ fused kernel -------------------------------- #

def _bottleneck_kernel(xp_ref, mask_ref, w1_ref, t1_ref, w2_ref, t2_ref,
                       w3_ref, s3_ref, t3_ref, o_ref):
    # xp:   (1, Hp, Wp, CINP) f32   spatially padded (+1 ring) & lane-padded input
    # mask: (Hp*Wp, 1)       f32    1.0 on interior rows, 0.0 on the padding ring
    # w1:(CINP,MIDP) w2:(9*MIDP,MIDP) w3:(MIDP,COUTP)  bf16 (BN not folded in)
    # t1,t2:(1,MIDP)  s3,t3:(1,COUTP) f32 (BN/bias/theta folded thresholds+scale)
    # o:    (1, H, W, COUTP) f32    output spikes (lane-dense)
    _, Hp, Wp, CINP = xp_ref.shape
    _, H, W, COUTP = o_ref.shape
    MIDP = w1_ref.shape[1]
    HW = H * W

    xp = xp_ref[0]                                     # (Hp, Wp, CINP) f32
    xp2d = xp.reshape(Hp * Wp, CINP)                   # Wp % 8 == 0 -> aligned

    # --- conv1 (1x1) + bn1 + lif1 : spike = (x @ w1 > t1), ring masked to 0 ---
    a1 = jnp.dot(xp2d.astype(jnp.bfloat16), w1_ref[...],
                 preferred_element_type=jnp.float32)   # (Hp*Wp, MIDP)
    interior = mask_ref[...] > 0.5                     # (Hp*Wp, 1)
    s1 = jnp.where((a1 > t1_ref[...]) & interior, 1.0, 0.0).astype(jnp.bfloat16)
    s1r = s1.reshape(Hp, Wp, MIDP)                     # zero-padded spike map

    # --- conv2 (3x3, pad=1) + bn2 + lif2 : 9 tap matmuls, K = MIDP = 128 ------
    acc = jnp.zeros((HW, MIDP), jnp.float32)
    for k in range(9):
        ky, kx = k // 3, k % 3
        patch = s1r[ky:ky + H, kx:kx + W, :].reshape(HW, MIDP)
        acc = acc + jnp.dot(patch, w2_ref[pl.ds(k * MIDP, MIDP), :],
                            preferred_element_type=jnp.float32)
    s2 = jnp.where(acc > t2_ref[...], 1.0, 0.0).astype(jnp.bfloat16)

    # --- conv3 (1x1) + bn3 + identity residual + lif3 -------------------------
    a3 = jnp.dot(s2, w3_ref[...], preferred_element_type=jnp.float32)
    identity = xp[1:1 + H, 1:1 + W, :].reshape(HW, COUTP)   # f32 interior of x
    y3 = a3 * s3_ref[...] + identity
    o_ref[0] = jnp.where(y3 > t3_ref[...], 1.0, 0.0).astype(o_ref.dtype) \
                  .reshape(H, W, COUTP)


# --------------------------------- wrapper ----------------------------------- #

def bottleneck_forward(x_nchw, params, stride=1, downsample=None):
    """Bottleneck forward (identity-residual path: stride=1, downsample=None)."""
    assert stride == 1 and downsample is None, "only identity-residual path implemented"
    N, C, H, W = x_nchw.shape
    CINP, MIDP = params['w1'].shape
    COUTP = params['w3'].shape[1]
    cout = params['cout']
    assert C == params['cin'] and C == cout, "identity path needs inplanes == planes"

    Hp = H + 2
    Wp = _round_up(W + 2, 8)        # sublane-aligned padded width

    # boundary layout plumbing (hoisted across blocks in a full model):
    # NCHW -> NHWC, zero-pad the conv2 halo ring and lane-pad channels to 128.
    x = jnp.transpose(x_nchw, (0, 2, 3, 1)).astype(jnp.float32)
    xp = jnp.pad(x, ((0, 0), (1, 1), (1, Wp - W - 1), (0, CINP - C)))

    # interior mask of the flattened (Hp*Wp) padded map
    ii = jnp.arange(Hp)[:, None]
    jj = jnp.arange(Wp)[None, :]
    interior = (ii >= 1) & (ii <= H) & (jj >= 1) & (jj <= W)
    mask = interior.reshape(Hp * Wp, 1).astype(jnp.float32)

    out = pl.pallas_call(
        _bottleneck_kernel,
        out_shape=jax.ShapeDtypeStruct((N, H, W, COUTP), jnp.float32),
        grid=(N,),
        in_specs=[
            pl.BlockSpec((1, Hp, Wp, CINP), lambda n: (n, 0, 0, 0)),
            pl.BlockSpec((Hp * Wp, 1), lambda n: (0, 0)),
            pl.BlockSpec((CINP, MIDP), lambda n: (0, 0)),
            pl.BlockSpec((1, MIDP), lambda n: (0, 0)),
            pl.BlockSpec((9 * MIDP, MIDP), lambda n: (0, 0)),
            pl.BlockSpec((1, MIDP), lambda n: (0, 0)),
            pl.BlockSpec((MIDP, COUTP), lambda n: (0, 0)),
            pl.BlockSpec((1, COUTP), lambda n: (0, 0)),
            pl.BlockSpec((1, COUTP), lambda n: (0, 0)),
        ],
        out_specs=pl.BlockSpec((1, H, W, COUTP), lambda n: (n, 0, 0, 0)),
        compiler_params=pltpu.CompilerParams(dimension_semantics=("parallel",)),
    )(xp, mask, params['w1'], params['t1'], params['w2'], params['t2'],
      params['w3'], params['s3'], params['t3'])

    out = out[..., :cout]                        # drop lane padding
    return jnp.transpose(out, (0, 3, 1, 2))      # NHWC -> NCHW (module boundary)


# ----------------------------- parameter handling ---------------------------- #

def init_params(key, inplanes, planes):
    """Synthetic params in PyTorch layout (`raw`) + kernel-ready folded form."""
    mid = planes // 4                            # expansion = 4
    ks = jax.random.split(key, 9)
    bf16_vals = lambda a: a.astype(jnp.bfloat16).astype(jnp.float32)

    def conv_w(k, cout, cin, kh, kw):
        fan_in = cin * kh * kw
        w = jax.random.normal(k, (cout, cin, kh, kw), jnp.float32) / jnp.sqrt(fan_in)
        return bf16_vals(w)                      # exactly bf16-representable weights

    def conv_b(k, cout):
        return 0.05 * jax.random.normal(k, (cout,), jnp.float32)

    def bn_params(k, c):
        k1, k2, k3, k4 = jax.random.split(k, 4)
        gamma = 1.0 + 0.1 * jax.random.normal(k1, (c,), jnp.float32)
        beta = 0.1 * jax.random.normal(k2, (c,), jnp.float32)
        mean = 0.1 * jax.random.normal(k3, (c,), jnp.float32)
        var = 0.5 + jnp.abs(jax.random.normal(k4, (c,), jnp.float32))
        return gamma, beta, mean, var

    raw = {
        'w1': conv_w(ks[0], mid, inplanes, 1, 1), 'cb1': conv_b(ks[1], mid),
        'bn1': bn_params(ks[2], mid),
        'w2': conv_w(ks[3], mid, mid, 3, 3), 'cb2': conv_b(ks[4], mid),
        'bn2': bn_params(ks[5], mid),
        'w3': conv_w(ks[6], planes, mid, 1, 1), 'cb3': conv_b(ks[7], planes),
        'bn3': bn_params(ks[8], planes),
    }

    def fold(cb, bn):
        g, b, m, v = bn
        scale = g / jnp.sqrt(v + BN_EPS)
        shift = b + (cb - m) * scale
        return scale, shift

    s1, sh1 = fold(raw['cb1'], raw['bn1'])
    s2, sh2 = fold(raw['cb2'], raw['bn2'])
    s3, sh3 = fold(raw['cb3'], raw['bn3'])
    # the pure-threshold fold assumes positive BN scales (true for these params)
    assert bool(jnp.all(s1 > 0) & jnp.all(s2 > 0) & jnp.all(s3 > 0))

    CINP = _round_up(inplanes, LANE)
    MIDP = _round_up(mid, LANE)
    COUTP = _round_up(planes, LANE)

    def pad2(a, r, c):
        out = jnp.zeros((r, c), jnp.float32)
        return out.at[:a.shape[0], :a.shape[1]].set(a)

    def pad_row(a, c, fill):
        out = jnp.full((1, c), fill, jnp.float32)
        return out.at[0, :a.shape[0]].set(a)

    # 1x1 convs: OIHW -> (Cin, Cout), lane-padded, bf16
    w1 = pad2(raw['w1'][:, :, 0, 0].T, CINP, MIDP).astype(jnp.bfloat16)
    w3 = pad2(raw['w3'][:, :, 0, 0].T, MIDP, COUTP).astype(jnp.bfloat16)
    # 3x3 conv: OIHW -> (ky,kx,Cin,Cout) -> (9*MIDP, MIDP); row = (ky*3+kx)*MIDP + cin
    w2_t = jnp.transpose(raw['w2'], (2, 3, 1, 0))
    w2 = jnp.zeros((3, 3, MIDP, MIDP), jnp.float32)
    w2 = w2.at[:, :, :mid, :mid].set(w2_t).reshape(9 * MIDP, MIDP).astype(jnp.bfloat16)

    params = {
        'w1': w1, 'w2': w2, 'w3': w3,
        # per-channel spike thresholds (BN + conv bias + LIF theta folded);
        # padded channels get +BIG so they never spike.
        't1': pad_row((THETA - sh1) / s1, MIDP, BIG),
        't2': pad_row((THETA - sh2) / s2, MIDP, BIG),
        's3': pad_row(s3, COUTP, 0.0),
        't3': pad_row(THETA - sh3, COUTP, BIG),
        'cin': inplanes, 'cout': planes,
    }
    return raw, params


def ref_forward(x, raw):
    """Pure-JAX reference with PyTorch semantics (NCHW, f32): conv + BN (inference)
    followed by a single-step zero-state LIF (Heaviside at THETA)."""
    def conv_bn(xx, w, cb, bn, s, pad):
        y = jax.lax.conv_general_dilated(
            xx, w, (s, s), ((pad, pad), (pad, pad)),
            dimension_numbers=('NCHW', 'OIHW', 'NCHW'))
        y = y + cb[None, :, None, None]
        g, b, m, v = bn
        sc = g / jnp.sqrt(v + BN_EPS)
        return (y - m[None, :, None, None]) * sc[None, :, None, None] + b[None, :, None, None]

    lif = lambda v: (v > THETA).astype(jnp.float32)
    out = lif(conv_bn(x, raw['w1'], raw['cb1'], raw['bn1'], 1, 0))
    out = lif(conv_bn(out, raw['w2'], raw['cb2'], raw['bn2'], 1, 1))
    out = conv_bn(out, raw['w3'], raw['cb3'], raw['bn3'], 1, 0)
    return lif(out + x)


# ------------------------------------ main ----------------------------------- #

if __name__ == "__main__":
    key = jax.random.PRNGKey(0)
    kx, kp = jax.random.split(key)

    inplanes = planes = 32          # expansion=4 -> mid = 8 ; identity residual
    N, H, W = 2, 8, 8

    x = jax.random.normal(kx, (N, inplanes, H, W), jnp.float32)
    x = x.astype(jnp.bfloat16).astype(jnp.float32)   # bf16-representable test data
    raw, params = init_params(kp, inplanes, planes)

    fwd = jax.jit(lambda xx: bottleneck_forward(xx, params))
    out = jax.block_until_ready(fwd(x))

    ref = ref_forward(x, raw)
    assert out.shape == (N, planes, H, W), out.shape
    mismatch_frac = float(jnp.mean(jnp.abs(out - ref)))  # spikes are 0/1
    assert mismatch_frac < 1e-2, f"spike mismatch fraction {mismatch_frac}"

    print("KERNEL_OK")
</pallas_src>

<mosaic_0001>
module attributes {stable_mosaic.version = 11 : i64} {
  func.func @_bottleneck_kernel(%arg0: i32, %arg1: memref<1x10x16x128xf32, #tpu.memory_space<vmem>>, %arg2: memref<160x1xf32, #tpu.memory_space<vmem>>, %arg3: memref<128x128xbf16, #tpu.memory_space<vmem>>, %arg4: memref<1x128xf32, #tpu.memory_space<vmem>>, %arg5: memref<1152x128xbf16, #tpu.memory_space<vmem>>, %arg6: memref<1x128xf32, #tpu.memory_space<vmem>>, %arg7: memref<128x128xbf16, #tpu.memory_space<vmem>>, %arg8: memref<1x128xf32, #tpu.memory_space<vmem>>, %arg9: memref<1x128xf32, #tpu.memory_space<vmem>>, %arg10: memref<1x8x8x128xf32, #tpu.memory_space<vmem>>) attributes {dimension_semantics = [#tpu.dimension_semantics<parallel>], iteration_bounds = array<i64: 2>, scalar_prefetch = 0 : i64, scratch_operands = 0 : i64, tpu.core_type = #tpu.core_type<tc>, window_params = [{transform_indices = @transform_0, window_bounds = array<i64: 1, 10, 16, 128>}, {pipeline_mode = #tpu.pipeline_mode<synchronous>, transform_indices = @transform_1, window_bounds = array<i64: 160, 1>}, {pipeline_mode = #tpu.pipeline_mode<synchronous>, transform_indices = @transform_2, window_bounds = array<i64: 128, 128>}, {pipeline_mode = #tpu.pipeline_mode<synchronous>, transform_indices = @transform_3, window_bounds = array<i64: 1, 128>}, {pipeline_mode = #tpu.pipeline_mode<synchronous>, transform_indices = @transform_4, window_bounds = array<i64: 1152, 128>}, {pipeline_mode = #tpu.pipeline_mode<synchronous>, transform_indices = @transform_5, window_bounds = array<i64: 1, 128>}, {pipeline_mode = #tpu.pipeline_mode<synchronous>, transform_indices = @transform_6, window_bounds = array<i64: 128, 128>}, {pipeline_mode = #tpu.pipeline_mode<synchronous>, transform_indices = @transform_7, window_bounds = array<i64: 1, 128>}, {pipeline_mode = #tpu.pipeline_mode<synchronous>, transform_indices = @transform_8, window_bounds = array<i64: 1, 128>}, {transform_indices = @transform_9, window_bounds = array<i64: 1, 8, 8, 128>}]} {
    %c0 = arith.constant 0 : index
    %c0_0 = arith.constant 0 : index
    %c0_1 = arith.constant 0 : index
    %c0_2 = arith.constant 0 : index
    %0 = vector.load %arg1[%c0, %c0_0, %c0_1, %c0_2] : memref<1x10x16x128xf32, #tpu.memory_space<vmem>>, vector<1x10x16x128xf32>
    %1 = vector.shape_cast %0 : vector<1x10x16x128xf32> to vector<10x16x128xf32>
    %2 = vector.shape_cast %1 : vector<10x16x128xf32> to vector<160x128xf32>
    %3 = arith.truncf %2 : vector<160x128xf32> to vector<160x128xbf16>
    %c0_3 = arith.constant 0 : index
    %c0_4 = arith.constant 0 : index
    %4 = vector.load %arg3[%c0_3, %c0_4] : memref<128x128xbf16, #tpu.memory_space<vmem>>, vector<128x128xbf16>
    %cst = arith.constant dense<0.000000e+00> : vector<160x128xf32>
    %5 = tpu.matmul %3, %4, %cst {dimension_numbers = #tpu.dot_dimension_numbers<[1], [0], [0], [1], [0, 0, 1, 1], [], []>} : vector<160x128xbf16>, vector<128x128xbf16>, vector<160x128xf32> -> vector<160x128xf32>
    %c0_5 = arith.constant 0 : index
    %c0_6 = arith.constant 0 : index
    %6 = vector.load %arg2[%c0_5, %c0_6] : memref<160x1xf32, #tpu.memory_space<vmem>>, vector<160x1xf32>
    %cst_7 = arith.constant 5.000000e-01 : f32
    %7 = vector.broadcast %cst_7 : f32 to vector<160x1xf32>
    %8 = arith.cmpf ogt, %6, %7 : vector<160x1xf32>
    %c0_8 = arith.constant 0 : index
    %c0_9 = arith.constant 0 : index
    %9 = vector.load %arg4[%c0_8, %c0_9] : memref<1x128xf32, #tpu.memory_space<vmem>>, vector<1x128xf32>
    %10 = vector.broadcast %9 : vector<1x128xf32> to vector<160x128xf32>
    %11 = arith.cmpf ogt, %5, %10 : vector<160x128xf32>
    %12 = vector.broadcast %8 : vector<160x1xi1> to vector<160x128xi1>
    %13 = arith.andi %11, %12 : vector<160x128xi1>
    %cst_10 = arith.constant 1.000000e+00 : f32
    %cst_11 = arith.constant 0.000000e+00 : f32
    %14 = vector.broadcast %cst_10 : f32 to vector<160x128xf32>
    %15 = vector.broadcast %cst_11 : f32 to vector<160x128xf32>
    %16 = arith.select %13, %14, %15 : vector<160x128xi1>, vector<160x128xf32>
    %17 = arith.truncf %16 : vector<160x128xf32> to vector<160x128xbf16>
    %18 = vector.shape_cast %17 : vector<160x128xbf16> to vector<10x16x128xbf16>
    %cst_12 = arith.constant 0.000000e+00 : f32
    %19 = vector.broadcast %cst_12 : f32 to vector<64x128xf32>
    %20 = vector.extract_strided_slice %18 {offsets = [0, 0, 0], sizes = [8, 8, 128], strides = [1, 1, 1]} : vector<10x16x128xbf16> to vector<8x8x128xbf16>
    %21 = vector.shape_cast %20 : vector<8x8x128xbf16> to vector<64x128xbf16>
    %c0_13 = arith.constant 0 : index
    %c0_14 = arith.constant 0 : index
    %22 = vector.load %arg5[%c0_13, %c0_14] : memref<1152x128xbf16, #tpu.memory_space<vmem>>, vector<128x128xbf16>
    %cst_15 = arith.constant dense<0.000000e+00> : vector<64x128xf32>
    %23 = tpu.matmul %21, %22, %cst_15 {dimension_numbers = #tpu.dot_dimension_numbers<[1], [0], [0], [1], [0, 0, 1, 1], [], []>} : vector<64x128xbf16>, vector<128x128xbf16>, vector<64x128xf32> -> vector<64x128xf32>
    %24 = arith.addf %19, %23 : vector<64x128xf32>
    %25 = vector.extract_strided_slice %18 {offsets = [0, 1, 0], sizes = [8, 8, 128], strides = [1, 1, 1]} : vector<10x16x128xbf16> to vector<8x8x128xbf16>
    %26 = vector.shape_cast %25 : vector<8x8x128xbf16> to vector<64x128xbf16>
    %c128 = arith.constant 128 : index
    %c0_16 = arith.constant 0 : index
    %27 = vector.load %arg5[%c128, %c0_16] : memref<1152x128xbf16, #tpu.memory_space<vmem>>, vector<128x128xbf16>
    %cst_17 = arith.constant dense<0.000000e+00> : vector<64x128xf32>
    %28 = tpu.matmul %26, %27, %cst_17 {dimension_numbers = #tpu.dot_dimension_numbers<[1], [0], [0], [1], [0, 0, 1, 1], [], []>} : vector<64x128xbf16>, vector<128x128xbf16>, vector<64x128xf32> -> vector<64x128xf32>
    %29 = arith.addf %24, %28 : vector<64x128xf32>
    %30 = vector.extract_strided_slice %18 {offsets = [0, 2, 0], sizes = [8, 8, 128], strides = [1, 1, 1]} : vector<10x16x128xbf16> to vector<8x8x128xbf16>
    %31 = vector.shape_cast %30 : vector<8x8x128xbf16> to vector<64x128xbf16>
    %c256 = arith.constant 256 : index
    %c0_18 = arith.constant 0 : index
    %32 = vector.load %arg5[%c256, %c0_18] : memref<1152x128xbf16, #tpu.memory_space<vmem>>, vector<128x128xbf16>
    %cst_19 = arith.constant dense<0.000000e+00> : vector<64x128xf32>
    %33 = tpu.matmul %31, %32, %cst_19 {dimension_numbers = #tpu.dot_dimension_numbers<[1], [0], [0], [1], [0, 0, 1, 1], [], []>} : vector<64x128xbf16>, vector<128x128xbf16>, vector<64x128xf32> -> vector<64x128xf32>
    %34 = arith.addf %29, %33 : vector<64x128xf32>
    %35 = vector.extract_strided_slice %18 {offsets = [1, 0, 0], sizes = [8, 8, 128], strides = [1, 1, 1]} : vector<10x16x128xbf16> to vector<8x8x128xbf16>
    %36 = vector.shape_cast %35 : vector<8x8x128xbf16> to vector<64x128xbf16>
    %c384 = arith.constant 384 : index
    %c0_20 = arith.constant 0 : index
    %37 = vector.load %arg5[%c384, %c0_20] : memref<1152x128xbf16, #tpu.memory_space<vmem>>, vector<128x128xbf16>
    %cst_21 = arith.constant dense<0.000000e+00> : vector<64x128xf32>
    %38 = tpu.matmul %36, %37, %cst_21 {dimension_numbers = #tpu.dot_dimension_numbers<[1], [0], [0], [1], [0, 0, 1, 1], [], []>} : vector<64x128xbf16>, vector<128x128xbf16>, vector<64x128xf32> -> vector<64x128xf32>
    %39 = arith.addf %34, %38 : vector<64x128xf32>
    %40 = vector.extract_strided_slice %18 {offsets = [1, 1, 0], sizes = [8, 8, 128], strides = [1, 1, 1]} : vector<10x16x128xbf16> to vector<8x8x128xbf16>
    %41 = vector.shape_cast %40 : vector<8x8x128xbf16> to vector<64x128xbf16>
    %c512 = arith.constant 512 : index
    %c0_22 = arith.constant 0 : index
    %42 = vector.load %arg5[%c512, %c0_22] : memref<1152x128xbf16, #tpu.memory_space<vmem>>, vector<128x128xbf16>
    %cst_23 = arith.constant dense<0.000000e+00> : vector<64x128xf32>
    %43 = tpu.matmul %41, %42, %cst_23 {dimension_numbers = #tpu.dot_dimension_numbers<[1], [0], [0], [1], [0, 0, 1, 1], [], []>} : vector<64x128xbf16>, vector<128x128xbf16>, vector<64x128xf32> -> vector<64x128xf32>
    %44 = arith.addf %39, %43 : vector<64x128xf32>
    %45 = vector.extract_strided_slice %18 {offsets = [1, 2, 0], sizes = [8, 8, 128], strides = [1, 1, 1]} : vector<10x16x128xbf16> to vector<8x8x128xbf16>
    %46 = vector.shape_cast %45 : vector<8x8x128xbf16> to vector<64x128xbf16>
    %c640 = arith.constant 640 : index
    %c0_24 = arith.constant 0 : index
    %47 = vector.load %arg5[%c640, %c0_24] : memref<1152x128xbf16, #tpu.memory_space<vmem>>, vector<128x128xbf16>
    %cst_25 = arith.constant dense<0.000000e+00> : vector<64x128xf32>
    %48 = tpu.matmul %46, %47, %cst_25 {dimension_numbers = #tpu.dot_dimension_numbers<[1], [0], [0], [1], [0, 0, 1, 1], [], []>} : vector<64x128xbf16>, vector<128x128xbf16>, vector<64x128xf32> -> vector<64x128xf32>
    %49 = arith.addf %44, %48 : vector<64x128xf32>
    %50 = vector.extract_strided_slice %18 {offsets = [2, 0, 0], sizes = [8, 8, 128], strides = [1, 1, 1]} : vector<10x16x128xbf16> to vector<8x8x128xbf16>
    %51 = vector.shape_cast %50 : vector<8x8x128xbf16> to vector<64x128xbf16>
    %c768 = arith.constant 768 : index
    %c0_26 = arith.constant 0 : index
    %52 = vector.load %arg5[%c768, %c0_26] : memref<1152x128xbf16, #tpu.memory_space<vmem>>, vector<128x128xbf16>
    %cst_27 = arith.constant dense<0.000000e+00> : vector<64x128xf32>
    %53 = tpu.matmul %51, %52, %cst_27 {dimension_numbers = #tpu.dot_dimension_numbers<[1], [0], [0], [1], [0, 0, 1, 1], [], []>} : vector<64x128xbf16>, vector<128x128xbf16>, vector<64x128xf32> -> vector<64x128xf32>
    %54 = arith.addf %49, %53 : vector<64x128xf32>
    %55 = vector.extract_strided_slice %18 {offsets = [2, 1, 0], sizes = [8, 8, 128], strides = [1, 1, 1]} : vector<10x16x128xbf16> to vector<8x8x128xbf16>
    %56 = vector.shape_cast %55 : vector<8x8x128xbf16> to vector<64x128xbf16>
    %c896 = arith.constant 896 : index
    %c0_28 = arith.constant 0 : index
    %57 = vector.load %arg5[%c896, %c0_28] : memref<1152x128xbf16, #tpu.memory_space<vmem>>, vector<128x128xbf16>
    %cst_29 = arith.constant dense<0.000000e+00> : vector<64x128xf32>
    %58 = tpu.matmul %56, %57, %cst_29 {dimension_numbers = #tpu.dot_dimension_numbers<[1], [0], [0], [1], [0, 0, 1, 1], [], []>} : vector<64x128xbf16>, vector<128x128xbf16>, vector<64x128xf32> -> vector<64x128xf32>
    %59 = arith.addf %54, %58 : vector<64x128xf32>
    %60 = vector.extract_strided_slice %18 {offsets = [2, 2, 0], sizes = [8, 8, 128], strides = [1, 1, 1]} : vector<10x16x128xbf16> to vector<8x8x128xbf16>
    %61 = vector.shape_cast %60 : vector<8x8x128xbf16> to vector<64x128xbf16>
    %c1024 = arith.constant 1024 : index
    %c0_30 = arith.constant 0 : index
    %62 = vector.load %arg5[%c1024, %c0_30] : memref<1152x128xbf16, #tpu.memory_space<vmem>>, vector<128x128xbf16>
    %cst_31 = arith.constant dense<0.000000e+00> : vector<64x128xf32>
    %63 = tpu.matmul %61, %62, %cst_31 {dimension_numbers = #tpu.dot_dimension_numbers<[1], [0], [0], [1], [0, 0, 1, 1], [], []>} : vector<64x128xbf16>, vector<128x128xbf16>, vector<64x128xf32> -> vector<64x128xf32>
    %64 = arith.addf %59, %63 : vector<64x128xf32>
    %c0_32 = arith.constant 0 : index
    %c0_33 = arith.constant 0 : index
    %65 = vector.load %arg6[%c0_32, %c0_33] : memref<1x128xf32, #tpu.memory_space<vmem>>, vector<1x128xf32>
    %66 = vector.broadcast %65 : vector<1x128xf32> to vector<64x128xf32>
    %67 = arith.cmpf ogt, %64, %66 : vector<64x128xf32>
    %cst_34 = arith.constant 1.000000e+00 : f32
    %cst_35 = arith.constant 0.000000e+00 : f32
    %68 = vector.broadcast %cst_34 : f32 to vector<64x128xf32>
    %69 = vector.broadcast %cst_35 : f32 to vector<64x128xf32>
    %70 = arith.select %67, %68, %69 : vector<64x128xi1>, vector<64x128xf32>
    %71 = arith.truncf %70 : vector<64x128xf32> to vector<64x128xbf16>
    %c0_36 = arith.constant 0 : index
    %c0_37 = arith.constant 0 : index
    %72 = vector.load %arg7[%c0_36, %c0_37] : memref<128x128xbf16, #tpu.memory_space<vmem>>, vector<128x128xbf16>
    %cst_38 = arith.constant dense<0.000000e+00> : vector<64x128xf32>
    %73 = tpu.matmul %71, %72, %cst_38 {dimension_numbers = #tpu.dot_dimension_numbers<[1], [0], [0], [1], [0, 0, 1, 1], [], []>} : vector<64x128xbf16>, vector<128x128xbf16>, vector<64x128xf32> -> vector<64x128xf32>
    %74 = vector.extract_strided_slice %1 {offsets = [1, 1, 0], sizes = [8, 8, 128], strides = [1, 1, 1]} : vector<10x16x128xf32> to vector<8x8x128xf32>
    %75 = vector.shape_cast %74 : vector<8x8x128xf32> to vector<64x128xf32>
    %c0_39 = arith.constant 0 : index
    %c0_40 = arith.constant 0 : index
    %76 = vector.load %arg8[%c0_39, %c0_40] : memref<1x128xf32, #tpu.memory_space<vmem>>, vector<1x128xf32>
    %77 = vector.broadcast %76 : vector<1x128xf32> to vector<64x128xf32>
    %78 = arith.mulf %73, %77 : vector<64x128xf32>
    %79 = arith.addf %78, %75 : vector<64x128xf32>
    %c0_41 = arith.constant 0 : index
    %c0_42 = arith.constant 0 : index
    %80 = vector.load %arg9[%c0_41, %c0_42] : memref<1x128xf32, #tpu.memory_space<vmem>>, vector<1x128xf32>
    %81 = vector.broadcast %80 : vector<1x128xf32> to vector<64x128xf32>
    %82 = arith.cmpf ogt, %79, %81 : vector<64x128xf32>
    %cst_43 = arith.constant 1.000000e+00 : f32
    %cst_44 = arith.constant 0.000000e+00 : f32
    %83 = vector.broadcast %cst_43 : f32 to vector<64x128xf32>
    %84 = vector.broadcast %cst_44 : f32 to vector<64x128xf32>
    %85 = arith.select %82, %83, %84 : vector<64x128xi1>, vector<64x128xf32>
    %86 = vector.shape_cast %85 : vector<64x128xf32> to vector<8x8x128xf32>
    %c0_45 = arith.constant 0 : index
    %c0_46 = arith.constant 0 : index
    %c0_47 = arith.constant 0 : index
    %c0_48 = arith.constant 0 : index
    %87 = vector.load %arg10[%c0_45, %c0_46, %c0_47, %c0_48] : memref<1x8x8x128xf32, #tpu.memory_space<vmem>>, vector<1x8x8x128xf32>
    %88 = vector.shape_cast %87 : vector<1x8x8x128xf32> to vector<8x8x128xf32>
    %89 = vector.shape_cast %86 : vector<8x8x128xf32> to vector<1x8x8x128xf32>
    tpu.vector_store %arg10[%c0_45, %c0_46, %c0_47, %c0_48], %89 {strides = array<i32>} : memref<1x8x8x128xf32, #tpu.memory_space<vmem>>, vector<1x8x8x128xf32>,
    return
  }
  func.func @transform_0(%arg0: i32) -> (i32, i32, i32, i32) {
    %c0_i32 = arith.constant 0 : i32
    %c0_i32_0 = arith.constant 0 : i32
    %c0_i32_1 = arith.constant 0 : i32
    %c0_i32_2 = arith.constant 0 : i32
    return %arg0, %c0_i32, %c0_i32_0, %c0_i32_1 : i32, i32, i32, i32
  }
  func.func @transform_1(%arg0: i32) -> (i32, i32) {
    %c0_i32 = arith.constant 0 : i32
    %c0_i32_0 = arith.constant 0 : i32
    %c0_i32_1 = arith.constant 0 : i32
    return %c0_i32, %c0_i32_0 : i32, i32
  }
  func.func @transform_2(%arg0: i32) -> (i32, i32) {
    %c0_i32 = arith.constant 0 : i32
    %c0_i32_0 = arith.constant 0 : i32
    %c0_i32_1 = arith.constant 0 : i32
    return %c0_i32, %c0_i32_0 : i32, i32
  }
  func.func @transform_3(%arg0: i32) -> (i32, i32) {
    %c0_i32 = arith.constant 0 : i32
    %c0_i32_0 = arith.constant 0 : i32
    %c0_i32_1 = arith.constant 0 : i32
    return %c0_i32, %c0_i32_0 : i32, i32
  }
  func.func @transform_4(%arg0: i32) -> (i32, i32) {
    %c0_i32 = arith.constant 0 : i32
    %c0_i32_0 = arith.constant 0 : i32
    %c0_i32_1 = arith.constant 0 : i32
    return %c0_i32, %c0_i32_0 : i32, i32
  }
  func.func @transform_5(%arg0: i32) -> (i32, i32) {
    %c0_i32 = arith.constant 0 : i32
    %c0_i32_0 = arith.constant 0 : i32
    %c0_i32_1 = arith.constant 0 : i32
    return %c0_i32, %c0_i32_0 : i32, i32
  }
  func.func @transform_6(%arg0: i32) -> (i32, i32) {
    %c0_i32 = arith.constant 0 : i32
    %c0_i32_0 = arith.constant 0 : i32
    %c0_i32_1 = arith.constant 0 : i32
    return %c0_i32, %c0_i32_0 : i32, i32
  }
  func.func @transform_7(%arg0: i32) -> (i32, i32) {
    %c0_i32 = arith.constant 0 : i32
    %c0_i32_0 = arith.constant 0 : i32
    %c0_i32_1 = arith.constant 0 : i32
    return %c0_i32, %c0_i32_0 : i32, i32
  }
  func.func @transform_8(%arg0: i32) -> (i32, i32) {
    %c0_i32 = arith.constant 0 : i32
    %c0_i32_0 = arith.constant 0 : i32
    %c0_i32_1 = arith.constant 0 : i32
    return %c0_i32, %c0_i32_0 : i32, i32
  }
  func.func @transform_9(%arg0: i32) -> (i32, i32, i32, i32) {
    %c0_i32 = arith.constant 0 : i32
    %c0_i32_0 = arith.constant 0 : i32
    %c0_i32_1 = arith.constant 0 : i32
    %c0_i32_2 = arith.constant 0 : i32
    return %arg0, %c0_i32, %c0_i32_0, %c0_i32_1 : i32, i32, i32, i32
  }
}

</mosaic_0001>

<llo_original>
// kernel: _lambda_.1
$region0: #{_lambda_.1}
  #allocation0 [shape = 'u32[]', space=smem, size = 0x4, offset = 0x4, fixed_abs, tag = 'smem constant byte address 0x4 - core index']
  #allocation1 [shape = 'u32[72,128]{1,0:T(1,128)}', space=vmem, size = 0x9000, scoped, tag = 'internal scratch']
  %s0 = inlined_call_operand.vmem [shape: f32[2,10,16,128], index: 0, kind: input, shape index: {}]
  %s1 = inlined_call_operand.vmem [shape: f32[160,1], index: 1, kind: input, shape index: {}]
  %s2 = inlined_call_operand.vmem [shape: bf16[128,128], index: 2, kind: input, shape index: {}]
  %s3 = inlined_call_operand.vmem [shape: f32[1,128], index: 3, kind: input, shape index: {}]
  %s4 = inlined_call_operand.hbm [shape: bf16[1152,128], index: 4, kind: input, shape index: {}]
  %s5 = inlined_call_operand.vmem [shape: f32[1,128], index: 5, kind: input, shape index: {}]
  %s6 = inlined_call_operand.vmem [shape: bf16[128,128], index: 6, kind: input, shape index: {}]
  %s7 = inlined_call_operand.vmem [shape: f32[1,128], index: 7, kind: input, shape index: {}]
  %s8 = inlined_call_operand.vmem [shape: f32[1,128], index: 8, kind: input, shape index: {}]
  %s9 = inlined_call_operand.vmem [shape: f32[2,8,8,128], index: 9, kind: output, shape index: {}]
  %s10 = sld [smem:[#allocation0]]
  $region73: #{_lambda_.1} parent=0
    _
  %s12 = ssub.s32 1, %s10
  %s13 = scalar_select 0, %s12, %s10
  $region1: #{_lambda_.1} parent=0
    #allocation2 [shape = 'u8[294912]{0}', space=vmem, size = 0x48000, scoped, tag = 'input window, operand 4, single buffered']
    #allocation3 [shape = 's32[2]{0}', space=sflag, size = 0x8, scoped, tag = 'scoped memory for _lambda_.1']
    %14 = vsyncpa [#allocation3], 0
    loop: start=0, step=1, limit=4
    $region2: #{_lambda_.1} parent=1 // loop_pre_header
      _
    $region3: #{_lambda_.1} parent=1 // loop_header
      %s16 = sphi 0, %s20
      %p17 = scmp.ge.s32.totalorder %s16, 4
      %s26 = sphi 0, %s28
      %s29 = sphi 0, %s26
      %s30 = sphi 0, %s29
      %s46 = sphi 0, %s30
      %s50 = sphi 0, %s50
      %s52 = sphi 0, %s50
      %s53 = sphi 0, %s52
      %s67 = sphi 0, %s53
      %s71 = sphi 0, %s71
      %s73 = sphi 0, %s71
      %s74 = sphi 0, %s73
      %s88 = sphi 0, %s74
      %s92 = sphi 0, %s92
      %s94 = sphi 0, %s92
      %s95 = sphi 0, %s94
      %s109 = sphi 0, %s95
      %s113 = sphi 0, %s113
      %s115 = sphi 0, %s113
      %s116 = sphi 0, %s115
      %s130 = sphi 0, %s116
      %s134 = sphi 0, %s134
      %s136 = sphi 0, %s134
      %s137 = sphi 0, %s136
      %s151 = sphi 0, %s137
      %s155 = sphi 0, %s155
      %s157 = sphi 0, %s155
      %s158 = sphi 0, %s157
      %s172 = sphi 0, %s158
      %s176 = sphi 0, %s176
      %s178 = sphi 0, %s176
      %s179 = sphi 0, %s178
      %s193 = sphi 0, %s179
      %s197 = sphi 0, %s197
      %s199 = sphi 0, %s197
      %s200 = sphi 0, %s199
      %s214 = sphi 0, %s200
      %s220 = sphi 0, %s222
      %s223 = sphi 0, %s220
      %s224 = sphi 0, %s223
      %s240 = sphi 0, %s224
    $region4: #{_lambda_.1} parent=1 // loop_header_branch
      %19 = sbr.rel (%p17) target = $region8
    $region5: #{_lambda_.1} parent=1 // loop_body
      %s21 = ssub.s32 %s16, 1
      %s22 = ssub.s32 %s16, 2
      %s23 = sadd.s32 %s16, 1
      %s24 = ssub.s32 %s16, %s23
      %p25 = scmp.eq.s32.totalorder %s24, 0
      %s27 = sadd.s32 %s26, 1
      %s28 = scalar_select %p25, %s26, %s27
      %p31 = pneg %p25
      %p32 = scmp.eq.s32.totalorder %s16, 1
      %p33 = por %p31, %p32
      %p34 = scmp.ne.s32.totalorder %s26, %s29
      %p35 = scmp.eq.s32.totalorder %s16, 0
      %p36 = por %p34, %p35
      %p37 = scmp.ne.s32.totalorder %s26, %s29
      %p38 = scmp.eq.s32.totalorder %s21, 1
      %p39 = por %p37, %p38
      %p40 = scmp.ne.s32.totalorder %s29, %s30
      %p41 = scmp.eq.s32.totalorder %s21, 0
      %p42 = por %p40, %p41
      %p43 = scmp.ne.s32.totalorder %s29, %s30
      %p44 = scmp.eq.s32.totalorder %s22, 1
      %p45 = por %p43, %p44
      %p47 = scmp.ne.s32.totalorder %s30, %s46
      %p48 = scmp.eq.s32.totalorder %s22, 0
      %p49 = por %p47, %p48
      %s51 = sadd.s32 %s50, 1
      %p54 = scmp.eq.s32.totalorder %s16, 1
      %p55 = scmp.ne.s32.totalorder %s50, %s52
      %p56 = scmp.eq.s32.totalorder %s16, 0
      %p57 = por %p55, %p56
      %p58 = scmp.ne.s32.totalorder %s50, %s52
      %p59 = scmp.eq.s32.totalorder %s21, 1
      %p60 = por %p58, %p59
      %p61 = scmp.ne.s32.totalorder %s52, %s53
      %p62 = scmp.eq.s32.totalorder %s21, 0
      %p63 = por %p61, %p62
      %p64 = scmp.ne.s32.totalorder %s52, %s53
      %p65 = scmp.eq.s32.totalorder %s22, 1
      %p66 = por %p64, %p65
      %p68 = scmp.ne.s32.totalorder %s53, %s67
      %p69 = scmp.eq.s32.totalorder %s22, 0
      %p70 = por %p68, %p69
      %s72 = sadd.s32 %s71, 1
      %p75 = scmp.eq.s32.totalorder %s16, 1
      %p76 = scmp.ne.s32.totalorder %s71, %s73
      %p77 = scmp.eq.s32.totalorder %s16, 0
      %p78 = por %p76, %p77
      %p79 = scmp.ne.s32.totalorder %s71, %s73
      %p80 = scmp.eq.s32.totalorder %s21, 1
      %p81 = por %p79, %p80
      %p82 = scmp.ne.s32.totalorder %s73, %s74
      %p83 = scmp.eq.s32.totalorder %s21, 0
      %p84 = por %p82, %p83
      %p85 = scmp.ne.s32.totalorder %s73, %s74
      %p86 = scmp.eq.s32.totalorder %s22, 1
      %p87 = por %p85, %p86
      %p89 = scmp.ne.s32.totalorder %s74, %s88
      %p90 = scmp.eq.s32.totalorder %s22, 0
      %p91 = por %p89, %p90
      %s93 = sadd.s32 %s92, 1
      %p96 = scmp.eq.s32.totalorder %s16, 1
      %p97 = scmp.ne.s32.totalorder %s92, %s94
      %p98 = scmp.eq.s32.totalorder %s16, 0
      %p99 = por %p97, %p98
      %p100 = scmp.ne.s32.totalorder %s92, %s94
      %p101 = scmp.eq.s32.totalorder %s21, 1
      %p102 = por %p100, %p101
      %p103 = scmp.ne.s32.totalorder %s94, %s95
      %p104 = scmp.eq.s32.totalorder %s21, 0
      %p105 = por %p103, %p104
      %p106 = scmp.ne.s32.totalorder %s94, %s95
      %p107 = scmp.eq.s32.totalorder %s22, 1
      %p108 = por %p106, %p107
      %p110 = scmp.ne.s32.totalorder %s95, %s109
      %p111 = scmp.eq.s32.totalorder %s22, 0
      %p112 = por %p110, %p111
      %s114 = sadd.s32 %s113, 1
      %p117 = scmp.eq.s32.totalorder %s16, 1
      %p118 = scmp.ne.s32.totalorder %s113, %s115
      %p119 = scmp.eq.s32.totalorder %s16, 0
      %p120 = por %p118, %p119
      %p121 = scmp.ne.s32.totalorder %s113, %s115
      %p122 = scmp.eq.s32.totalorder %s21, 1
      %p123 = por %p121, %p122
      %p124 = scmp.ne.s32.totalorder %s115, %s116
      %p125 = scmp.eq.s32.totalorder %s21, 0
      %p126 = por %p124, %p125
      %p127 = scmp.ne.s32.totalorder %s115, %s116
      %p128 = scmp.eq.s32.totalorder %s22, 1
      %p129 = por %p127, %p128
      %p131 = scmp.ne.s32.totalorder %s116, %s130
      %p132 = scmp.eq.s32.totalorder %s22, 0
      %p133 = por %p131, %p132
      %s135 = sadd.s32 %s134, 1
      %p138 = scmp.eq.s32.totalorder %s16, 1
      %p139 = scmp.ne.s32.totalorder %s134, %s136
      %p140 = scmp.eq.s32.totalorder %s16, 0
      %p141 = por %p139, %p140
      %p142 = scmp.ne.s32.totalorder %s134, %s136
      %p143 = scmp.eq.s32.totalorder %s21, 1
      %p144 = por %p142, %p143
      %p145 = scmp.ne.s32.totalorder %s136, %s137
      %p146 = scmp.eq.s32.totalorder %s21, 0
      %p147 = por %p145, %p146
      %p148 = scmp.ne.s32.totalorder %s136, %s137
      %p149 = scmp.eq.s32.totalorder %s22, 1
      %p150 = por %p148, %p149
      %p152 = scmp.ne.s32.totalorder %s137, %s151
      %p153 = scmp.eq.s32.totalorder %s22, 0
      %p154 = por %p152, %p153
      %s156 = sadd.s32 %s155, 1
      %p159 = scmp.eq.s32.totalorder %s16, 1
      %p160 = scmp.ne.s32.totalorder %s155, %s157
      %p161 = scmp.eq.s32.totalorder %s16, 0
      %p162 = por %p160, %p161
      %p163 = scmp.ne.s32.totalorder %s155, %s157
      %p164 = scmp.eq.s32.totalorder %s21, 1
      %p165 = por %p163, %p164
      %p166 = scmp.ne.s32.totalorder %s157, %s158
      %p167 = scmp.eq.s32.totalorder %s21, 0
      %p168 = por %p166, %p167
      %p169 = scmp.ne.s32.totalorder %s157, %s158
      %p170 = scmp.eq.s32.totalorder %s22, 1
      %p171 = por %p169, %p170
      %p173 = scmp.ne.s32.totalorder %s158, %s172
      %p174 = scmp.eq.s32.totalorder %s22, 0
      %p175 = por %p173, %p174
      %s177 = sadd.s32 %s176, 1
      %p180 = scmp.eq.s32.totalorder %s16, 1
      %p181 = scmp.ne.s32.totalorder %s176, %s178
      %p182 = scmp.eq.s32.totalorder %s16, 0
      %p183 = por %p181, %p182
      %p184 = scmp.ne.s32.totalorder %s176, %s178
      %p185 = scmp.eq.s32.totalorder %s21, 1
      %p186 = por %p184, %p185
      %p187 = scmp.ne.s32.totalorder %s178, %s179
      %p188 = scmp.eq.s32.totalorder %s21, 0
      %p189 = por %p187, %p188
      %p190 = scmp.ne.s32.totalorder %s178, %s179
      %p191 = scmp.eq.s32.totalorder %s22, 1
      %p192 = por %p190, %p191
      %p194 = scmp.ne.s32.totalorder %s179, %s193
      %p195 = scmp.eq.s32.totalorder %s22, 0
      %p196 = por %p194, %p195
      %s198 = sadd.s32 %s197, 1
      %p201 = scmp.eq.s32.totalorder %s16, 1
      %p202 = scmp.ne.s32.totalorder %s197, %s199
      %p203 = scmp.eq.s32.totalorder %s16, 0
      %p204 = por %p202, %p203
      %p205 = scmp.ne.s32.totalorder %s197, %s199
      %p206 = scmp.eq.s32.totalorder %s21, 1
      %p207 = por %p205, %p206
      %p208 = scmp.ne.s32.totalorder %s199, %s200
      %p209 = scmp.eq.s32.totalorder %s21, 0
      %p210 = por %p208, %p209
      %p211 = scmp.ne.s32.totalorder %s199, %s200
      %p212 = scmp.eq.s32.totalorder %s22, 1
      %p213 = por %p211, %p212
      %p215 = scmp.ne.s32.totalorder %s200, %s214
      %p216 = scmp.eq.s32.totalorder %s22, 0
      %p217 = por %p215, %p216
      %s218 = ssub.s32 %s16, %s23
      %p219 = scmp.eq.s32.totalorder %s218, 0
      %s221 = sadd.s32 %s220, 1
      %s222 = scalar_select %p219, %s220, %s221
      %p225 = pneg %p219
      %p226 = scmp.eq.s32.totalorder %s16, 1
      %p227 = por %p225, %p226
      %p228 = scmp.ne.s32.totalorder %s220, %s223
      %p229 = scmp.eq.s32.totalorder %s16, 0
      %p230 = por %p228, %p229
      %p231 = scmp.ne.s32.totalorder %s220, %s223
      %p232 = scmp.eq.s32.totalorder %s21, 1
      %p233 = por %p231, %p232
      %p234 = scmp.ne.s32.totalorder %s223, %s224
      %p235 = scmp.eq.s32.totalorder %s21, 0
      %p236 = por %p234, %p235
      %p237 = scmp.ne.s32.totalorder %s223, %s224
      %p238 = scmp.eq.s32.totalorder %s22, 1
      %p239 = por %p237, %p238
      %p241 = scmp.ne.s32.totalorder %s224, %s240
      %p242 = scmp.eq.s32.totalorder %s22, 0
      %p243 = por %p241, %p242
      %p244 = scmp.le.s32.totalorder 1, %s16
      %p245 = scmp.lt.s32.totalorder %s16, 3
      %p246 = pnand %p244, %p245
      %p247 = pneg %p246
      // Predicated region
      $region9: #{_lambda_.1} parent=5 // pred_check
        _
      $region10: #{_lambda_.1} parent=5 // pred_check_branch
        %249 = sbr.rel (%p246) target = $region12
      $region11: #{_lambda_.1} parent=5 // pred_region
        %s250 = ssub.s32 %s16, 1
        // Predicated region
        $region13: #{_lambda_.1} parent=11 // pred_check
          %p251 = pneg %p63
        $region14: #{_lambda_.1} parent=11 // pred_check_branch
          %253 = sbr.rel (%p251) target = $region16
        $region15: #{_lambda_.1} parent=11 // pred_region
          _
        $region16: #{_lambda_.1} parent=11 // pred_fallthru
          _
        // Predicated region
        $region17: #{_lambda_.1} parent=11 // pred_check
          %p254 = pneg %p84
        $region18: #{_lambda_.1} parent=11 // pred_check_branch
          %256 = sbr.rel (%p254) target = $region20
        $region19: #{_lambda_.1} parent=11 // pred_region
          _
        $region20: #{_lambda_.1} parent=11 // pred_fallthru
          _
        // Predicated region
        $region21: #{_lambda_.1} parent=11 // pred_check
          %p257 = pneg %p105
        $region22: #{_lambda_.1} parent=11 // pred_check_branch
          %259 = sbr.rel (%p257) target = $region24
        $region23: #{_lambda_.1} parent=11 // pred_region
          _
        $region24: #{_lambda_.1} parent=11 // pred_fallthru
          _
        // Predicated region
        $region25: #{_lambda_.1} parent=11 // pred_check
          %p260 = pneg %p126
        $region26: #{_lambda_.1} parent=11 // pred_check_branch
          %262 = sbr.rel (%p260) target = $region28
        $region27: #{_lambda_.1} parent=11 // pred_region
          %264 = vsyncadd [#allocation3], 0
          %s265 = sshll.u32 %s4, 4
          %s266 = int_to_ptr.hbm [resolvable:$true] %s265
          %s267 = sshll.u32 [#allocation2], 4
          %s268 = int_to_ptr.vmem [resolvable:$true] %s267
          %273 = dma.hbm_to_vmem [thread:$0]  %s266, 9216, %s268, [#allocation3], 64, 64, 4
        $region28: #{_lambda_.1} parent=11 // pred_fallthru
          _
        // Predicated region
        $region29: #{_lambda_.1} parent=11 // pred_check
          %p274 = pneg %p147
        $region30: #{_lambda_.1} parent=11 // pred_check_branch
          %276 = sbr.rel (%p274) target = $region32
        $region31: #{_lambda_.1} parent=11 // pred_region
          _
        $region32: #{_lambda_.1} parent=11 // pred_fallthru
          _
        // Predicated region
        $region33: #{_lambda_.1} parent=11 // pred_check
          %p277 = pneg %p168
        $region34: #{_lambda_.1} parent=11 // pred_check_branch
          %279 = sbr.rel (%p277) target = $region36
        $region35: #{_lambda_.1} parent=11 // pred_region
          _
        $region36: #{_lambda_.1} parent=11 // pred_fallthru
          _
        // Predicated region
        $region37: #{_lambda_.1} parent=11 // pred_check
          %p280 = pneg %p189
        $region38: #{_lambda_.1} parent=11 // pred_check_branch
          %282 = sbr.rel (%p280) target = $region40
        $region39: #{_lambda_.1} parent=11 // pred_region
          _
        $region40: #{_lambda_.1} parent=11 // pred_fallthru
          _
        // Predicated region
        $region41: #{_lambda_.1} parent=11 // pred_check
          %p283 = pneg %p210
        $region42: #{_lambda_.1} parent=11 // pred_check_branch
          %285 = sbr.rel (%p283) target = $region44
        $region43: #{_lambda_.1} parent=11 // pred_region
          _
        $region44: #{_lambda_.1} parent=11 // pred_fallthru
          _
      $region12: #{_lambda_.1} parent=5 // pred_fallthru
        _
      %p286 = scmp.lt.s32.totalorder %s16, 2
      // Predicated region
      $region45: #{_lambda_.1} parent=5 // pred_check
        %p287 = pneg %p286
      $region46: #{_lambda_.1} parent=5 // pred_check_branch
        %289 = sbr.rel (%p287) target = $region48
      $region47: #{_lambda_.1} parent=5 // pred_region
        // Predicated region
        $region49: #{_lambda_.1} parent=47 // pred_check
          %p290 = pneg %p36
        $region50: #{_lambda_.1} parent=47 // pred_check_branch
          %292 = sbr.rel (%p290) target = $region52
        $region51: #{_lambda_.1} parent=47 // pred_region
          %p293 = scmp.lt.s32.totalorder %s16, 1
          %s294 = scalar_select %p293, %s16, 1
          %s295 = smul.addr %s294, 20
          %s296 = smul.addr %s295, 8
          %s297 = scalar_lea.vmem %s0, %s296
        $region52: #{_lambda_.1} parent=47 // pred_fallthru
          _
      $region48: #{_lambda_.1} parent=5 // pred_fallthru
        _
      %p298 = scmp.le.s32.totalorder 1, %s16
      %p299 = scmp.lt.s32.totalorder %s16, 3
      %p300 = pnand %p298, %p299
      %p301 = pneg %p300
      // Predicated region
      $region53: #{_lambda_.1} parent=5 // pred_check
        _
      $region54: #{_lambda_.1} parent=5 // pred_check_branch
        %303 = sbr.rel (%p300) target = $region56
      $region55: #{_lambda_.1} parent=5 // pred_region
        %s304 = ssub.s32 %s16, 1
        // Predicated region
        $region57: #{_lambda_.1} parent=55 // pred_check
          %p305 = pneg %p126
        $region58: #{_lambda_.1} parent=55 // pred_check_branch
          %307 = sbr.rel (%p305) target = $region60
        $region59: #{_lambda_.1} parent=55 // pred_region
          %309 = dma.done [#allocation3], 9216
        $region60: #{_lambda_.1} parent=55 // pred_fallthru
          _
        %p310 = scmp.lt.s32.totalorder %s21, 1
        %s311 = scalar_select %p310, %s21, 1
        %s312 = smul.addr %s311, 20
        %s313 = smul.addr %s312, 8
        %s314 = scalar_lea.vmem %s0, %s313
        %p315 = pneg %p42
        %p316 = pneg %p39
        %p317 = pneg %p63
        %p318 = pneg %p60
        %p319 = pneg %p84
        %p320 = pneg %p81
        %p321 = pneg %p105
        %p322 = pneg %p102
        %p323 = pneg %p126
        %p324 = pneg %p123
        %p325 = pneg %p147
        %p326 = pneg %p144
        %p327 = pneg %p168
        %p328 = pneg %p165
        %p329 = pneg %p189
        %p330 = pneg %p186
        %p331 = pneg %p210
        %p332 = pneg %p207
        %p333 = pneg %p236
        %p334 = pneg %p233
        %p335 = scmp.lt.s32.totalorder %s21, 1
        %s336 = scalar_select %p335, %s21, 1
        %s337 = smul.addr %s336, 8
        %s338 = smul.addr %s337, 8
        %s339 = scalar_lea.vmem %s9, %s338
        %p340 = scmp.lt.s32.totalorder %s21, 1
        %s341 = scalar_select %p340, %s21, 1
        %s342 = smul.addr %s341, 20
        %s343 = smul.addr %s342, 8
        %s344 = scalar_lea.vmem %s0, %s343
        %p345 = scmp.lt.s32.totalorder %s21, 1
        %s346 = scalar_select %p345, %s21, 1
        %s347 = smul.addr %s346, 8
        %s348 = smul.addr %s347, 8
        %s349 = scalar_lea.vmem %s9, %s348
        %v350 = vld [vmem:[%s344] sm:$0xff]
        %v351 = vld [vmem:[%s344 + $0x8] sm:$0xff]
        %v352 = vld [vmem:[%s344 + $0x10] sm:$0xff]
        %v353 = vld [vmem:[%s344 + $0x18] sm:$0xff]
        %v354 = vld [vmem:[%s344 + $0x20] sm:$0xff]
        %v355 = vld [vmem:[%s344 + $0x28] sm:$0xff]
        %v356 = vld [vmem:[%s344 + $0x30] sm:$0xff]
        %v357 = vld [vmem:[%s344 + $0x38] sm:$0xff]
        %v358 = vld [vmem:[%s344 + $0x40] sm:$0xff]
        %v359 = vld [vmem:[%s344 + $0x48] sm:$0xff]
        %v360 = vld [vmem:[%s344 + $0x50] sm:$0xff]
        %v361 = vld [vmem:[%s344 + $0x58] sm:$0xff]
        %v362 = vld [vmem:[%s344 + $0x60] sm:$0xff]
        %v363 = vld [vmem:[%s344 + $0x68] sm:$0xff]
        %v364 = vld [vmem:[%s344 + $0x70] sm:$0xff]
        %v365 = vld [vmem:[%s344 + $0x78] sm:$0xff]
        %v366 = vld [vmem:[%s344 + $0x80] sm:$0xff]
        %v367 = vld [vmem:[%s344 + $0x88] sm:$0xff]
        %v368 = vld [vmem:[%s344 + $0x90] sm:$0xff]
        %v369 = vld [vmem:[%s344 + $0x98] sm:$0xff]
        %v370 = vpack.c.bf16 %v351, %v350
        %v371 = vpack.c.bf16 %v353, %v352
        %v372 = vpack.c.bf16 %v355, %v354
        %v373 = vpack.c.bf16 %v357, %v356
        %v374 = vpack.c.bf16 %v359, %v358
        %v375 = vpack.c.bf16 %v361, %v360
        %v376 = vpack.c.bf16 %v363, %v362
        %v377 = vpack.c.bf16 %v365, %v364
        %v378 = vpack.c.bf16 %v367, %v366
        %v379 = vpack.c.bf16 %v369, %v368
        %v380 = vld [vmem:[%s2] sm:$0xf]
        %v381 = vld [vmem:[%s2 + $0x4] sm:$0xf]
        %v382 = vld [vmem:[%s2 + $0x8] sm:$0xf]
        %v383 = vld [vmem:[%s2 + $0xc] sm:$0xf]
        %v384 = vld [vmem:[%s2 + $0x10] sm:$0xf]
        %v385 = vld [vmem:[%s2 + $0x14] sm:$0xf]
        %v386 = vld [vmem:[%s2 + $0x18] sm:$0xf]
        %v387 = vld [vmem:[%s2 + $0x1c] sm:$0xf]
        %v388 = vld [vmem:[%s2 + $0x20] sm:$0xf]
        %v389 = vld [vmem:[%s2 + $0x24] sm:$0xf]
        %v390 = vld [vmem:[%s2 + $0x28] sm:$0xf]
        %v391 = vld [vmem:[%s2 + $0x2c] sm:$0xf]
        %v392 = vld [vmem:[%s2 + $0x30] sm:$0xf]
        %v393 = vld [vmem:[%s2 + $0x34] sm:$0xf]
        %v394 = vld [vmem:[%s2 + $0x38] sm:$0xf]
        %v395 = vld [vmem:[%s2 + $0x3c] sm:$0xf]
        %v412 = vunpack.c.l.b16 %v380
        %v413 = vunpack.c.l.b16 %v381
        %v414 = vunpack.c.l.b16 %v382
        %v415 = vunpack.c.l.b16 %v383
        %v416 = vunpack.c.l.b16 %v384
        %v417 = vunpack.c.l.b16 %v385
        %v418 = vunpack.c.l.b16 %v386
        %v419 = vunpack.c.l.b16 %v387
        %v420 = vunpack.c.l.b16 %v388
        %v421 = vunpack.c.l.b16 %v389
        %v422 = vunpack.c.l.b16 %v390
        %v423 = vunpack.c.l.b16 %v391
        %v424 = vunpack.c.l.b16 %v392
        %v425 = vunpack.c.l.b16 %v393
        %v426 = vunpack.c.l.b16 %v394
        %v427 = vunpack.c.l.b16 %v395
        %v428 = vpack.c.b16 %v413, %v412
        %v429 = vpack.c.b16 %v415, %v414
        %v430 = vpack.c.b16 %v417, %v416
        %v431 = vpack.c.b16 %v419, %v418
        %v432 = vpack.c.b16 %v421, %v420
        %v433 = vpack.c.b16 %v423, %v422
        %v434 = vpack.c.b16 %v425, %v424
        %v435 = vpack.c.b16 %v427, %v426
        %444 = vmatpush.bf16.msra.mxu0 %v435
        %445 = vmatpush.bf16.msra.mxu0 %v434
        %446 = vmatpush.bf16.msra.mxu0 %v433
        %447 = vmatpush.bf16.msra.mxu0 %v432
        %448 = vmatpush.bf16.msra.mxu0 %v431
        %449 = vmatpush.bf16.msra.mxu0 %v430
        %450 = vmatpush.bf16.msra.mxu0 %v429
        %451 = vmatpush.bf16.msra.mxu0 %v428
        %452 = vmatmul.bf16.gmra.mxu0 %v370
        %v453 = vpop.f32.mrf.mxu0
        %v454 = vadd.f32 0.0, %v453
        %v455 = vpop.f32.mrf.mxu0
        %v456 = vadd.f32 0.0, %v455
        %457 = vmatmul.bf16.gmra.mxu0 %v371
        %v458 = vpop.f32.mrf.mxu0
        %v459 = vadd.f32 0.0, %v458
        %v460 = vpop.f32.mrf.mxu0
        %v461 = vadd.f32 0.0, %v460
        %462 = vmatmul.bf16.gmra.mxu0 %v372
        %v463 = vpop.f32.mrf.mxu0
        %v464 = vadd.f32 0.0, %v463
        %v465 = vpop.f32.mrf.mxu0
        %v466 = vadd.f32 0.0, %v465
        %467 = vmatmul.bf16.gmra.mxu0 %v373
        %v468 = vpop.f32.mrf.mxu0
        %v469 = vadd.f32 0.0, %v468
        %v470 = vpop.f32.mrf.mxu0
        %v471 = vadd.f32 0.0, %v470
        %472 = vmatmul.bf16.gmra.mxu0 %v374
        %v473 = vpop.f32.mrf.mxu0
        %v474 = vadd.f32 0.0, %v473
        %v475 = vpop.f32.mrf.mxu0
        %v476 = vadd.f32 0.0, %v475
        %477 = vmatmul.bf16.gmra.mxu0 %v375
        %v478 = vpop.f32.mrf.mxu0
        %v479 = vadd.f32 0.0, %v478
        %v480 = vpop.f32.mrf.mxu0
        %v481 = vadd.f32 0.0, %v480
        %482 = vmatmul.bf16.gmra.mxu0 %v376
        %v483 = vpop.f32.mrf.mxu0
        %v484 = vadd.f32 0.0, %v483
        %v485 = vpop.f32.mrf.mxu0
        %v486 = vadd.f32 0.0, %v485
        %487 = vmatmul.bf16.gmra.mxu0 %v377
        %v488 = vpop.f32.mrf.mxu0
        %v489 = vadd.f32 0.0, %v488
        %v490 = vpop.f32.mrf.mxu0
        %v491 = vadd.f32 0.0, %v490
        %492 = vmatmul.bf16.gmra.mxu0 %v378
        %v493 = vpop.f32.mrf.mxu0
        %v494 = vadd.f32 0.0, %v493
        %v495 = vpop.f32.mrf.mxu0
        %v496 = vadd.f32 0.0, %v495
        %497 = vmatmul.bf16.gmra.mxu0 %v379
        %v498 = vpop.f32.mrf.mxu0
        %v499 = vadd.f32 0.0, %v498
        %v500 = vpop.f32.mrf.mxu0
        %v501 = vadd.f32 0.0, %v500
        %502 = vdwg.mxu0
        %v503 = vld [vmem:[%s1] sm:$0xff]
        %v504 = vld [vmem:[%s1 + $0x8] sm:$0xff]
        %v505 = vld [vmem:[%s1 + $0x10] sm:$0xff]
        %v506 = vld [vmem:[%s1 + $0x18] sm:$0xff]
        %v507 = vld [vmem:[%s1 + $0x20] sm:$0xff]
        %v508 = vld [vmem:[%s1 + $0x28] sm:$0xff]
        %v509 = vld [vmem:[%s1 + $0x30] sm:$0xff]
        %v510 = vld [vmem:[%s1 + $0x38] sm:$0xff]
        %v511 = vld [vmem:[%s1 + $0x40] sm:$0xff]
        %v512 = vld [vmem:[%s1 + $0x48] sm:$0xff]
        %v513 = vld [vmem:[%s1 + $0x50] sm:$0xff]
        %v514 = vld [vmem:[%s1 + $0x58] sm:$0xff]
        %v515 = vld [vmem:[%s1 + $0x60] sm:$0xff]
        %v516 = vld [vmem:[%s1 + $0x68] sm:$0xff]
        %v517 = vld [vmem:[%s1 + $0x70] sm:$0xff]
        %v518 = vld [vmem:[%s1 + $0x78] sm:$0xff]
        %v519 = vld [vmem:[%s1 + $0x80] sm:$0xff]
        %v520 = vld [vmem:[%s1 + $0x88] sm:$0xff]
        %v521 = vld [vmem:[%s1 + $0x90] sm:$0xff]
        %v522 = vld [vmem:[%s1 + $0x98] sm:$0xff]
        %vm523 = vcmp.gt.f32.partialorder %v503, 0.5
        %vm524 = vcmp.gt.f32.partialorder %v504, 0.5
        %vm525 = vcmp.gt.f32.partialorder %v505, 0.5
        %vm526 = vcmp.gt.f32.partialorder %v506, 0.5
        %vm527 = vcmp.gt.f32.partialorder %v507, 0.5
        %vm528 = vcmp.gt.f32.partialorder %v508, 0.5
        %vm529 = vcmp.gt.f32.partialorder %v509, 0.5
        %vm530 = vcmp.gt.f32.partialorder %v510, 0.5
        %vm531 = vcmp.gt.f32.partialorder %v511, 0.5
        %vm532 = vcmp.gt.f32.partialorder %v512, 0.5
        %vm533 = vcmp.gt.f32.partialorder %v513, 0.5
        %vm534 = vcmp.gt.f32.partialorder %v514, 0.5
        %vm535 = vcmp.gt.f32.partialorder %v515, 0.5
        %vm536 = vcmp.gt.f32.partialorder %v516, 0.5
        %vm537 = vcmp.gt.f32.partialorder %v517, 0.5
        %vm538 = vcmp.gt.f32.partialorder %v518, 0.5
        %vm539 = vcmp.gt.f32.partialorder %v519, 0.5
        %vm540 = vcmp.gt.f32.partialorder %v520, 0.5
        %vm541 = vcmp.gt.f32.partialorder %v521, 0.5
        %vm542 = vcmp.gt.f32.partialorder %v522, 0.5
        %v543 = vld [vmem:[%s3] sm:$0x1]
        %v545 = vperm.slane %v543, 0
        %vm547 = vcmp.gt.f32.partialorder %v454, %v545
        %vm548 = vcmp.gt.f32.partialorder %v456, %v545
        %vm549 = vcmp.gt.f32.partialorder %v459, %v545
        %vm550 = vcmp.gt.f32.partialorder %v461, %v545
        %vm551 = vcmp.gt.f32.partialorder %v464, %v545
        %vm552 = vcmp.gt.f32.partialorder %v466, %v545
        %vm553 = vcmp.gt.f32.partialorder %v469, %v545
        %vm554 = vcmp.gt.f32.partialorder %v471, %v545
        %vm555 = vcmp.gt.f32.partialorder %v474, %v545
        %vm556 = vcmp.gt.f32.partialorder %v476, %v545
        %vm557 = vcmp.gt.f32.partialorder %v479, %v545
        %vm558 = vcmp.gt.f32.partialorder %v481, %v545
        %vm559 = vcmp.gt.f32.partialorder %v484, %v545
        %vm560 = vcmp.gt.f32.partialorder %v486, %v545
        %vm561 = vcmp.gt.f32.partialorder %v489, %v545
        %vm562 = vcmp.gt.f32.partialorder %v491, %v545
        %vm563 = vcmp.gt.f32.partialorder %v494, %v545
        %vm564 = vcmp.gt.f32.partialorder %v496, %v545
        %vm565 = vcmp.gt.f32.partialorder %v499, %v545
        %vm566 = vcmp.gt.f32.partialorder %v501, %v545
        %v567 = vsel %vm523, 1, 0
        %v568 = vsel %vm524, 1, 0
        %v569 = vsel %vm525, 1, 0
        %v570 = vsel %vm526, 1, 0
        %v571 = vsel %vm527, 1, 0
        %v572 = vsel %vm528, 1, 0
        %v573 = vsel %vm529, 1, 0
        %v574 = vsel %vm530, 1, 0
        %v575 = vsel %vm531, 1, 0
        %v576 = vsel %vm532, 1, 0
        %v577 = vsel %vm533, 1, 0
        %v578 = vsel %vm534, 1, 0
        %v579 = vsel %vm535, 1, 0
        %v580 = vsel %vm536, 1, 0
        %v581 = vsel %vm537, 1, 0
        %v582 = vsel %vm538, 1, 0
        %v583 = vsel %vm539, 1, 0
        %v584 = vsel %vm540, 1, 0
        %v585 = vsel %vm541, 1, 0
        %v586 = vsel %vm542, 1, 0
        %587 = vset.pattern.permute.xlu0 0
        %588 = vperm.xlu0 %587, %v567
        %v589 = vpop.permute.xlu0 %588
        %590 = vset.pattern.permute.xlu0 0
        %591 = vperm.xlu0 %590, %v568
        %v592 = vpop.permute.xlu0 %591
        %593 = vset.pattern.permute.xlu0 0
        %594 = vperm.xlu0 %593, %v569
        %v595 = vpop.permute.xlu0 %594
        %596 = vset.pattern.permute.xlu0 0
        %597 = vperm.xlu0 %596, %v570
        %v598 = vpop.permute.xlu0 %597
        %599 = vset.pattern.permute.xlu0 0
        %600 = vperm.xlu0 %599, %v571
        %v601 = vpop.permute.xlu0 %600
        %602 = vset.pattern.permute.xlu0 0
        %603 = vperm.xlu0 %602, %v572
        %v604 = vpop.permute.xlu0 %603
        %605 = vset.pattern.permute.xlu0 0
        %606 = vperm.xlu0 %605, %v573
        %v607 = vpop.permute.xlu0 %606
        %608 = vset.pattern.permute.xlu0 0
        %609 = vperm.xlu0 %608, %v574
        %v610 = vpop.permute.xlu0 %609
        %611 = vset.pattern.permute.xlu0 0
        %612 = vperm.xlu0 %611, %v575
        %v613 = vpop.permute.xlu0 %612
        %614 = vset.pattern.permute.xlu0 0
        %615 = vperm.xlu0 %614, %v576
        %v616 = vpop.permute.xlu0 %615
        %617 = vset.pattern.permute.xlu0 0
        %618 = vperm.xlu0 %617, %v577
        %v619 = vpop.permute.xlu0 %618
        %620 = vset.pattern.permute.xlu0 0
        %621 = vperm.xlu0 %620, %v578
        %v622 = vpop.permute.xlu0 %621
        %623 = vset.pattern.permute.xlu0 0
        %624 = vperm.xlu0 %623, %v579
        %v625 = vpop.permute.xlu0 %624
        %626 = vset.pattern.permute.xlu0 0
        %627 = vperm.xlu0 %626, %v580
        %v628 = vpop.permute.xlu0 %627
        %629 = vset.pattern.permute.xlu0 0
        %630 = vperm.xlu0 %629, %v581
        %v631 = vpop.permute.xlu0 %630
        %632 = vset.pattern.permute.xlu0 0
        %633 = vperm.xlu0 %632, %v582
        %v634 = vpop.permute.xlu0 %633
        %635 = vset.pattern.permute.xlu0 0
        %636 = vperm.xlu0 %635, %v583
        %v637 = vpop.permute.xlu0 %636
        %638 = vset.pattern.permute.xlu0 0
        %639 = vperm.xlu0 %638, %v584
        %v640 = vpop.permute.xlu0 %639
        %641 = vset.pattern.permute.xlu0 0
        %642 = vperm.xlu0 %641, %v585
        %v643 = vpop.permute.xlu0 %642
        %644 = vset.pattern.permute.xlu0 0
        %645 = vperm.xlu0 %644, %v586
        %v646 = vpop.permute.xlu0 %645
        %vm647 = vcmp.eq.s32.totalorder %v589, 1
        %vm648 = vcmp.eq.s32.totalorder %v592, 1
        %vm649 = vcmp.eq.s32.totalorder %v595, 1
        %vm650 = vcmp.eq.s32.totalorder %v598, 1
        %vm651 = vcmp.eq.s32.totalorder %v601, 1
        %vm652 = vcmp.eq.s32.totalorder %v604, 1
        %vm653 = vcmp.eq.s32.totalorder %v607, 1
        %vm654 = vcmp.eq.s32.totalorder %v610, 1
        %vm655 = vcmp.eq.s32.totalorder %v613, 1
        %vm656 = vcmp.eq.s32.totalorder %v616, 1
        %vm657 = vcmp.eq.s32.totalorder %v619, 1
        %vm658 = vcmp.eq.s32.totalorder %v622, 1
        %vm659 = vcmp.eq.s32.totalorder %v625, 1
        %vm660 = vcmp.eq.s32.totalorder %v628, 1
        %vm661 = vcmp.eq.s32.totalorder %v631, 1
        %vm662 = vcmp.eq.s32.totalorder %v634, 1
        %vm663 = vcmp.eq.s32.totalorder %v637, 1
        %vm664 = vcmp.eq.s32.totalorder %v640, 1
        %vm665 = vcmp.eq.s32.totalorder %v643, 1
        %vm666 = vcmp.eq.s32.totalorder %v646, 1
        %vm667 = vmand %vm547, %vm647
        %vm668 = vmand %vm548, %vm648
        %vm669 = vmand %vm549, %vm649
        %vm670 = vmand %vm550, %vm650
        %vm671 = vmand %vm551, %vm651
        %vm672 = vmand %vm552, %vm652
        %vm673 = vmand %vm553, %vm653
        %vm674 = vmand %vm554, %vm654
        %vm675 = vmand %vm555, %vm655
        %vm676 = vmand %vm556, %vm656
        %vm677 = vmand %vm557, %vm657
        %vm678 = vmand %vm558, %vm658
        %vm679 = vmand %vm559, %vm659
        %vm680 = vmand %vm560, %vm660
        %vm681 = vmand %vm561, %vm661
        %vm682 = vmand %vm562, %vm662
        %vm683 = vmand %vm563, %vm663
        %vm684 = vmand %vm564, %vm664
        %vm685 = vmand %vm565, %vm665
        %vm686 = vmand %vm566, %vm666
        %v687 = vsel %vm667, 1.0, 0.0
        %v688 = vsel %vm668, 1.0, 0.0
        %v689 = vsel %vm669, 1.0, 0.0
        %v690 = vsel %vm670, 1.0, 0.0
        %v691 = vsel %vm671, 1.0, 0.0
        %v692 = vsel %vm672, 1.0, 0.0
        %v693 = vsel %vm673, 1.0, 0.0
        %v694 = vsel %vm674, 1.0, 0.0
        %v695 = vsel %vm675, 1.0, 0.0
        %v696 = vsel %vm676, 1.0, 0.0
        %v697 = vsel %vm677, 1.0, 0.0
        %v698 = vsel %vm678, 1.0, 0.0
        %v699 = vsel %vm679, 1.0, 0.0
        %v700 = vsel %vm680, 1.0, 0.0
        %v701 = vsel %vm681, 1.0, 0.0
        %v702 = vsel %vm682, 1.0, 0.0
        %v703 = vsel %vm683, 1.0, 0.0
        %v704 = vsel %vm684, 1.0, 0.0
        %v705 = vsel %vm685, 1.0, 0.0
        %v706 = vsel %vm686, 1.0, 0.0
        %v707 = vpack.c.bf16 %v687, %v687
        %v708 = vpack.c.bf16 %v688, %v688
        %v709 = vpack.c.bf16 %v689, %v689
        %v710 = vpack.c.bf16 %v690, %v690
        %v711 = vpack.c.bf16 %v691, %v691
        %v712 = vpack.c.bf16 %v692, %v692
        %v713 = vpack.c.bf16 %v693, %v693
        %v714 = vpack.c.bf16 %v694, %v694
        %v715 = vpack.c.bf16 %v695, %v695
        %v716 = vpack.c.bf16 %v696, %v696
        %v717 = vpack.c.bf16 %v697, %v697
        %v718 = vpack.c.bf16 %v698, %v698
        %v719 = vpack.c.bf16 %v699, %v699
        %v720 = vpack.c.bf16 %v700, %v700
        %v721 = vpack.c.bf16 %v701, %v701
        %v722 = vpack.c.bf16 %v702, %v702
        %v723 = vpack.c.bf16 %v703, %v703
        %v724 = vpack.c.bf16 %v704, %v704
        %v725 = vpack.c.bf16 %v705, %v705
        %v726 = vpack.c.bf16 %v706, %v706
        %v727 = vld [vmem:[#allocation2] sm:$0xf]
        %v728 = vld [vmem:[#allocation2 + $0x4] sm:$0xf]
        %v729 = vld [vmem:[#allocation2 + $0x8] sm:$0xf]
        %v730 = vld [vmem:[#allocation2 + $0xc] sm:$0xf]
        %v731 = vld [vmem:[#allocation2 + $0x10] sm:$0xf]
        %v732 = vld [vmem:[#allocation2 + $0x14] sm:$0xf]
        %v733 = vld [vmem:[#allocation2 + $0x18] sm:$0xf]
        %v734 = vld [vmem:[#allocation2 + $0x1c] sm:$0xf]
        %v735 = vld [vmem:[#allocation2 + $0x20] sm:$0xf]
        %v736 = vld [vmem:[#allocation2 + $0x24] sm:$0xf]
        %v737 = vld [vmem:[#allocation2 + $0x28] sm:$0xf]
        %v738 = vld [vmem:[#allocation2 + $0x2c] sm:$0xf]
        %v739 = vld [vmem:[#allocation2 + $0x30] sm:$0xf]
        %v740 = vld [vmem:[#allocation2 + $0x34] sm:$0xf]
        %v741 = vld [vmem:[#allocation2 + $0x38] sm:$0xf]
        %v742 = vld [vmem:[#allocation2 + $0x3c] sm:$0xf]
        %vm743 = vsmask.f32 3328
        %vm744 = vsmask.f32 7440
        %vm745 = vmor %vm743, %vm744
        %v747 = vshrl.u32 %v707, 16
        %v749 = vrot.slane %v747, 4
        %v750 = vshll.u32 %v707, 16
        %v752 = vrot.slane %v750, 5
        %v753 = vor.u32 %v749, %v752
        %v754 = vrot.slane %v753, 4
        %v756 = vshll.u32 %v708, 16
        %v758 = vrot.slane %v756, 5
        %v759 = vsel %vm745, %v754, %v758
        %v761 = vshrl.u32 %v709, 16
        %v763 = vrot.slane %v761, 4
        %v764 = vshll.u32 %v709, 16
        %v766 = vrot.slane %v764, 5
        %v767 = vor.u32 %v763, %v766
        %v768 = vrot.slane %v767, 4
        %v770 = vshll.u32 %v710, 16
        %v772 = vrot.slane %v770, 5
        %v773 = vsel %vm745, %v768, %v772
        %v775 = vshrl.u32 %v711, 16
        %v777 = vrot.slane %v775, 4
        %v778 = vshll.u32 %v711, 16
        %v780 = vrot.slane %v778, 5
        %v781 = vor.u32 %v777, %v780
        %v782 = vrot.slane %v781, 4
        %v784 = vshll.u32 %v712, 16
        %v786 = vrot.slane %v784, 5
        %v787 = vsel %vm745, %v782, %v786
        %v789 = vshrl.u32 %v713, 16
        %v791 = vrot.slane %v789, 4
        %v792 = vshll.u32 %v713, 16
        %v794 = vrot.slane %v792, 5
        %v795 = vor.u32 %v791, %v794
        %v796 = vrot.slane %v795, 4
        %v798 = vshll.u32 %v714, 16
        %v800 = vrot.slane %v798, 5
        %v801 = vsel %vm745, %v796, %v800
        %v803 = vshrl.u32 %v715, 16
        %v805 = vrot.slane %v803, 4
        %v806 = vshll.u32 %v715, 16
        %v808 = vrot.slane %v806, 5
        %v809 = vor.u32 %v805, %v808
        %v810 = vrot.slane %v809, 4
        %v812 = vshll.u32 %v716, 16
        %v814 = vrot.slane %v812, 5
        %v815 = vsel %vm745, %v810, %v814
        %v817 = vshrl.u32 %v717, 16
        %v819 = vrot.slane %v817, 4
        %v820 = vshll.u32 %v717, 16
        %v822 = vrot.slane %v820, 5
        %v823 = vor.u32 %v819, %v822
        %v824 = vrot.slane %v823, 4
        %v826 = vshll.u32 %v718, 16
        %v828 = vrot.slane %v826, 5
        %v829 = vsel %vm745, %v824, %v828
        %v831 = vshrl.u32 %v719, 16
        %v833 = vrot.slane %v831, 4
        %v834 = vshll.u32 %v719, 16
        %v836 = vrot.slane %v834, 5
        %v837 = vor.u32 %v833, %v836
        %v838 = vrot.slane %v837, 4
        %v840 = vshll.u32 %v720, 16
        %v842 = vrot.slane %v840, 5
        %v843 = vsel %vm745, %v838, %v842
        %v845 = vshrl.u32 %v721, 16
        %v847 = vrot.slane %v845, 4
        %v848 = vshll.u32 %v721, 16
        %v850 = vrot.slane %v848, 5
        %v851 = vor.u32 %v847, %v850
        %v852 = vrot.slane %v851, 4
        %v854 = vshll.u32 %v722, 16
        %v856 = vrot.slane %v854, 5
        %v857 = vsel %vm745, %v852, %v856
        %v858 = vld [vmem:[#allocation2 + $0x40] sm:$0xf]
        %v859 = vld [vmem:[#allocation2 + $0x44] sm:$0xf]
        %v860 = vld [vmem:[#allocation2 + $0x48] sm:$0xf]
        %v861 = vld [vmem:[#allocation2 + $0x4c] sm:$0xf]
        %v862 = vld [vmem:[#allocation2 + $0x50] sm:$0xf]
        %v863 = vld [vmem:[#allocation2 + $0x54] sm:$0xf]
        %v864 = vld [vmem:[#allocation2 + $0x58] sm:$0xf]
        %v865 = vld [vmem:[#allocation2 + $0x5c] sm:$0xf]
        %v866 = vld [vmem:[#allocation2 + $0x60] sm:$0xf]
        %v867 = vld [vmem:[#allocation2 + $0x64] sm:$0xf]
        %v868 = vld [vmem:[#allocation2 + $0x68] sm:$0xf]
        %v869 = vld [vmem:[#allocation2 + $0x6c] sm:$0xf]
        %v870 = vld [vmem:[#allocation2 + $0x70] sm:$0xf]
        %v871 = vld [vmem:[#allocation2 + $0x74] sm:$0xf]
        %v872 = vld [vmem:[#allocation2 + $0x78] sm:$0xf]
        %v873 = vld [vmem:[#allocation2 + $0x7c] sm:$0xf]
        %v874 = vunpack.c.l.b16 %v759
        %v875 = vunpack.c.l.b16 %v773
        %v876 = vunpack.c.l.b16 %v787
        %v877 = vunpack.c.l.b16 %v801
        %v878 = vunpack.c.l.b16 %v815
        %v879 = vunpack.c.l.b16 %v829
        %v880 = vunpack.c.l.b16 %v843
        %v881 = vunpack.c.l.b16 %v857
        %v882 = vpack.c.b16 %v875, %v874
        %v883 = vpack.c.b16 %v877, %v876
        %v884 = vpack.c.b16 %v879, %v878
        %v885 = vpack.c.b16 %v881, %v880
        %v906 = vunpack.c.l.b16 %v858
        %v907 = vunpack.c.l.b16 %v859
        %v908 = vunpack.c.l.b16 %v860
        %v909 = vunpack.c.l.b16 %v861
        %v910 = vunpack.c.l.b16 %v862
        %v911 = vunpack.c.l.b16 %v863
        %v912 = vunpack.c.l.b16 %v864
        %v913 = vunpack.c.l.b16 %v865
        %v914 = vunpack.c.l.b16 %v866
        %v915 = vunpack.c.l.b16 %v867
        %v916 = vunpack.c.l.b16 %v868
        %v917 = vunpack.c.l.b16 %v869
        %v918 = vunpack.c.l.b16 %v870
        %v919 = vunpack.c.l.b16 %v871
        %v920 = vunpack.c.l.b16 %v872
        %v921 = vunpack.c.l.b16 %v873
        %v922 = vpack.c.b16 %v907, %v906
        %v923 = vpack.c.b16 %v909, %v908
        %v924 = vpack.c.b16 %v911, %v910
        %v925 = vpack.c.b16 %v913, %v912
        %v926 = vpack.c.b16 %v915, %v914
        %v927 = vpack.c.b16 %v917, %v916
        %v928 = vpack.c.b16 %v919, %v918
        %v929 = vpack.c.b16 %v921, %v920
        %938 = vmatpush.bf16.msra.mxu0 %v929
        %939 = vmatpush.bf16.msra.mxu0 %v928
        %940 = vmatpush.bf16.msra.mxu0 %v927
        %941 = vmatpush.bf16.msra.mxu0 %v926
        %942 = vmatpush.bf16.msra.mxu0 %v925
        %943 = vmatpush.bf16.msra.mxu0 %v924
        %944 = vmatpush.bf16.msra.mxu0 %v923
        %945 = vmatpush.bf16.msra.mxu0 %v922
        %946 = vmatmul.bf16.gmra.mxu0 %v882
        %v947 = vpop.f32.mrf.mxu0
        %v948 = vadd.f32 0.0, %v947
        %v949 = vpop.f32.mrf.mxu0
        %v950 = vadd.f32 0.0, %v949
        %951 = vmatmul.bf16.gmra.mxu0 %v883
        %v952 = vpop.f32.mrf.mxu0
        %v953 = vadd.f32 0.0, %v952
        %v954 = vpop.f32.mrf.mxu0
        %v955 = vadd.f32 0.0, %v954
        %956 = vmatmul.bf16.gmra.mxu0 %v884
        %v957 = vpop.f32.mrf.mxu0
        %v958 = vadd.f32 0.0, %v957
        %v959 = vpop.f32.mrf.mxu0
        %v960 = vadd.f32 0.0, %v959
        %961 = vmatmul.bf16.gmra.mxu0 %v885
        %v962 = vpop.f32.mrf.mxu0
        %v963 = vadd.f32 0.0, %v962
        %v964 = vpop.f32.mrf.mxu0
        %v965 = vadd.f32 0.0, %v964
        %966 = vdwg.mxu0
        %v975 = vunpack.c.l.b16 %v707
        %v976 = vunpack.c.l.b16 %v709
        %v977 = vunpack.c.l.b16 %v711
        %v978 = vunpack.c.l.b16 %v713
        %v979 = vunpack.c.l.b16 %v715
        %v980 = vunpack.c.l.b16 %v717
        %v981 = vunpack.c.l.b16 %v719
        %v982 = vunpack.c.l.b16 %v721
        %v983 = vpack.c.b16 %v976, %v975
        %v984 = vpack.c.b16 %v978, %v977
        %v985 = vpack.c.b16 %v980, %v979
        %v986 = vpack.c.b16 %v982, %v981
        %v1007 = vunpack.c.l.b16 %v727
        %v1008 = vunpack.c.l.b16 %v728
        %v1009 = vunpack.c.l.b16 %v729
        %v1010 = vunpack.c.l.b16 %v730
        %v1011 = vunpack.c.l.b16 %v731
        %v1012 = vunpack.c.l.b16 %v732
        %v1013 = vunpack.c.l.b16 %v733
        %v1014 = vunpack.c.l.b16 %v734
        %v1015 = vunpack.c.l.b16 %v735
        %v1016 = vunpack.c.l.b16 %v736
        %v1017 = vunpack.c.l.b16 %v737
        %v1018 = vunpack.c.l.b16 %v738
        %v1019 = vunpack.c.l.b16 %v739
        %v1020 = vunpack.c.l.b16 %v740
        %v1021 = vunpack.c.l.b16 %v741
        %v1022 = vunpack.c.l.b16 %v742
        %v1023 = vpack.c.b16 %v1008, %v1007
        %v1024 = vpack.c.b16 %v1010, %v1009
        %v1025 = vpack.c.b16 %v1012, %v1011
        %v1026 = vpack.c.b16 %v1014, %v1013
        %v1027 = vpack.c.b16 %v1016, %v1015
        %v1028 = vpack.c.b16 %v1018, %v1017
        %v1029 = vpack.c.b16 %v1020, %v1019
        %v1030 = vpack.c.b16 %v1022, %v1021
        %1039 = vmatpush.bf16.msra.mxu0 %v1030
        %1040 = vmatpush.bf16.msra.mxu0 %v1029
        %1041 = vmatpush.bf16.msra.mxu0 %v1028
        %1042 = vmatpush.bf16.msra.mxu0 %v1027
        %1043 = vmatpush.bf16.msra.mxu0 %v1026
        %1044 = vmatpush.bf16.msra.mxu0 %v1025
        %1045 = vmatpush.bf16.msra.mxu0 %v1024
        %1046 = vmatpush.bf16.msra.mxu0 %v1023
        %1047 = vmatmul.bf16.gmra.mxu0 %v983
        %v1048 = vpop.f32.mrf.mxu0
        %v1049 = vadd.f32 %v948, %v1048
        %v1050 = vpop.f32.mrf.mxu0
        %v1051 = vadd.f32 %v950, %v1050
        %1052 = vmatmul.bf16.gmra.mxu0 %v984
        %v1053 = vpop.f32.mrf.mxu0
        %v1054 = vadd.f32 %v953, %v1053
        %v1055 = vpop.f32.mrf.mxu0
        %v1056 = vadd.f32 %v955, %v1055
        %1057 = vmatmul.bf16.gmra.mxu0 %v985
        %v1058 = vpop.f32.mrf.mxu0
        %v1059 = vadd.f32 %v958, %v1058
        %v1060 = vpop.f32.mrf.mxu0
        %v1061 = vadd.f32 %v960, %v1060
        %1062 = vmatmul.bf16.gmra.mxu0 %v986
        %v1063 = vpop.f32.mrf.mxu0
        %v1064 = vadd.f32 %v963, %v1063
        %v1065 = vpop.f32.mrf.mxu0
        %v1066 = vadd.f32 %v965, %v1065
        %1067 = vdwg.mxu0
        %vm1076 = vcmask 1042432
        %vm1077 = vcmask 1046532
        %vm1078 = vmor %vm1076, %vm1077
        %v1079 = vrot.slane %v707, 5
        %v1080 = vrot.slane %v1079, 4
        %v1081 = vrot.slane %v708, 5
        %v1082 = vsel %vm1078, %v1080, %v1081
        %v1083 = vrot.slane %v709, 5
        %v1084 = vrot.slane %v1083, 4
        %v1085 = vrot.slane %v710, 5
        %v1086 = vsel %vm1078, %v1084, %v1085
        %v1087 = vrot.slane %v711, 5
        %v1088 = vrot.slane %v1087, 4
        %v1089 = vrot.slane %v712, 5
        %v1090 = vsel %vm1078, %v1088, %v1089
        %v1091 = vrot.slane %v713, 5
        %v1092 = vrot.slane %v1091, 4
        %v1093 = vrot.slane %v714, 5
        %v1094 = vsel %vm1078, %v1092, %v1093
        %v1095 = vrot.slane %v715, 5
        %v1096 = vrot.slane %v1095, 4
        %v1097 = vrot.slane %v716, 5
        %v1098 = vsel %vm1078, %v1096, %v1097
        %v1099 = vrot.slane %v717, 5
        %v1100 = vrot.slane %v1099, 4
        %v1101 = vrot.slane %v718, 5
        %v1102 = vsel %vm1078, %v1100, %v1101
        %v1103 = vrot.slane %v719, 5
        %v1104 = vrot.slane %v1103, 4
        %v1105 = vrot.slane %v720, 5
        %v1106 = vsel %vm1078, %v1104, %v1105
        %v1107 = vrot.slane %v721, 5
        %v1108 = vrot.slane %v1107, 4
        %v1109 = vrot.slane %v722, 5
        %v1110 = vsel %vm1078, %v1108, %v1109
        %v1111 = vld [vmem:[#allocation2 + $0x80] sm:$0xf]
        %v1112 = vld [vmem:[#allocation2 + $0x84] sm:$0xf]
        %v1113 = vld [vmem:[#allocation2 + $0x88] sm:$0xf]
        %v1114 = vld [vmem:[#allocation2 + $0x8c] sm:$0xf]
        %v1115 = vld [vmem:[#allocation2 + $0x90] sm:$0xf]
        %v1116 = vld [vmem:[#allocation2 + $0x94] sm:$0xf]
        %v1117 = vld [vmem:[#allocation2 + $0x98] sm:$0xf]
        %v1118 = vld [vmem:[#allocation2 + $0x9c] sm:$0xf]
        %v1119 = vld [vmem:[#allocation2 + $0xa0] sm:$0xf]
        %v1120 = vld [vmem:[#allocation2 + $0xa4] sm:$0xf]
        %v1121 = vld [vmem:[#allocation2 + $0xa8] sm:$0xf]
        %v1122 = vld [vmem:[#allocation2 + $0xac] sm:$0xf]
        %v1123 = vld [vmem:[#allocation2 + $0xb0] sm:$0xf]
        %v1124 = vld [vmem:[#allocation2 + $0xb4] sm:$0xf]
        %v1125 = vld [vmem:[#allocation2 + $0xb8] sm:$0xf]
        %v1126 = vld [vmem:[#allocation2 + $0xbc] sm:$0xf]
        %v1127 = vunpack.c.l.b16 %v1082
        %v1128 = vunpack.c.l.b16 %v1086
        %v1129 = vunpack.c.l.b16 %v1090
        %v1130 = vunpack.c.l.b16 %v1094
        %v1131 = vunpack.c.l.b16 %v1098
        %v1132 = vunpack.c.l.b16 %v1102
        %v1133 = vunpack.c.l.b16 %v1106
        %v1134 = vunpack.c.l.b16 %v1110
        %v1135 = vpack.c.b16 %v1128, %v1127
        %v1136 = vpack.c.b16 %v1130, %v1129
        %v1137 = vpack.c.b16 %v1132, %v1131
        %v1138 = vpack.c.b16 %v1134, %v1133
        %v1159 = vunpack.c.l.b16 %v1111
        %v1160 = vunpack.c.l.b16 %v1112
        %v1161 = vunpack.c.l.b16 %v1113
        %v1162 = vunpack.c.l.b16 %v1114
        %v1163 = vunpack.c.l.b16 %v1115
        %v1164 = vunpack.c.l.b16 %v1116
        %v1165 = vunpack.c.l.b16 %v1117
        %v1166 = vunpack.c.l.b16 %v1118
        %v1167 = vunpack.c.l.b16 %v1119
        %v1168 = vunpack.c.l.b16 %v1120
        %v1169 = vunpack.c.l.b16 %v1121
        %v1170 = vunpack.c.l.b16 %v1122
        %v1171 = vunpack.c.l.b16 %v1123
        %v1172 = vunpack.c.l.b16 %v1124
        %v1173 = vunpack.c.l.b16 %v1125
        %v1174 = vunpack.c.l.b16 %v1126
        %v1175 = vpack.c.b16 %v1160, %v1159
        %v1176 = vpack.c.b16 %v1162, %v1161
        %v1177 = vpack.c.b16 %v1164, %v1163
        %v1178 = vpack.c.b16 %v1166, %v1165
        %v1179 = vpack.c.b16 %v1168, %v1167
        %v1180 = vpack.c.b16 %v1170, %v1169
        %v1181 = vpack.c.b16 %v1172, %v1171
        %v1182 = vpack.c.b16 %v1174, %v1173
        %1191 = vmatpush.bf16.msra.mxu0 %v1182
        %1192 = vmatpush.bf16.msra.mxu0 %v1181
        %1193 = vmatpush.bf16.msra.mxu0 %v1180
        %1194 = vmatpush.bf16.msra.mxu0 %v1179
        %1195 = vmatpush.bf16.msra.mxu0 %v1178
        %1196 = vmatpush.bf16.msra.mxu0 %v1177
        %1197 = vmatpush.bf16.msra.mxu0 %v1176
        %1198 = vmatpush.bf16.msra.mxu0 %v1175
        %1199 = vmatmul.bf16.gmra.mxu0 %v1135
        %v1200 = vpop.f32.mrf.mxu0
        %v1201 = vadd.f32 0.0, %v1200
        %v1202 = vpop.f32.mrf.mxu0
        %v1203 = vadd.f32 0.0, %v1202
        %1204 = vmatmul.bf16.gmra.mxu0 %v1136
        %v1205 = vpop.f32.mrf.mxu0
        %v1206 = vadd.f32 0.0, %v1205
        %v1207 = vpop.f32.mrf.mxu0
        %v1208 = vadd.f32 0.0, %v1207
        %1209 = vmatmul.bf16.gmra.mxu0 %v1137
        %v1210 = vpop.f32.mrf.mxu0
        %v1211 = vadd.f32 0.0, %v1210
        %v1212 = vpop.f32.mrf.mxu0
        %v1213 = vadd.f32 0.0, %v1212
        %1214 = vmatmul.bf16.gmra.mxu0 %v1138
        %v1215 = vpop.f32.mrf.mxu0
        %v1216 = vadd.f32 0.0, %v1215
        %v1217 = vpop.f32.mrf.mxu0
        %v1218 = vadd.f32 0.0, %v1217
        %1219 = vdwg.mxu0
        %v1220 = vadd.f32 %v1049, %v1201
        %v1221 = vadd.f32 %v1051, %v1203
        %v1222 = vadd.f32 %v1054, %v1206
        %v1223 = vadd.f32 %v1056, %v1208
        %v1224 = vadd.f32 %v1059, %v1211
        %v1225 = vadd.f32 %v1061, %v1213
        %v1226 = vadd.f32 %v1064, %v1216
        %v1227 = vadd.f32 %v1066, %v1218
        %v1228 = vld [vmem:[#allocation2 + $0xc0] sm:$0xf]
        %v1229 = vld [vmem:[#allocation2 + $0xc4] sm:$0xf]
        %v1230 = vld [vmem:[#allocation2 + $0xc8] sm:$0xf]
        %v1231 = vld [vmem:[#allocation2 + $0xcc] sm:$0xf]
        %v1232 = vld [vmem:[#allocation2 + $0xd0] sm:$0xf]
        %v1233 = vld [vmem:[#allocation2 + $0xd4] sm:$0xf]
        %v1234 = vld [vmem:[#allocation2 + $0xd8] sm:$0xf]
        %v1235 = vld [vmem:[#allocation2 + $0xdc] sm:$0xf]
        %v1236 = vld [vmem:[#allocation2 + $0xe0] sm:$0xf]
        %v1237 = vld [vmem:[#allocation2 + $0xe4] sm:$0xf]
        %v1238 = vld [vmem:[#allocation2 + $0xe8] sm:$0xf]
        %v1239 = vld [vmem:[#allocation2 + $0xec] sm:$0xf]
        %v1240 = vld [vmem:[#allocation2 + $0xf0] sm:$0xf]
        %v1241 = vld [vmem:[#allocation2 + $0xf4] sm:$0xf]
        %v1242 = vld [vmem:[#allocation2 + $0xf8] sm:$0xf]
        %v1243 = vld [vmem:[#allocation2 + $0xfc] sm:$0xf]
        %v1245 = vunpack.c.l.b16 %v723
        %v1246 = vpack.c.b16 %v977, %v976
        %v1247 = vpack.c.b16 %v979, %v978
        %v1248 = vpack.c.b16 %v981, %v980
        %v1249 = vpack.c.b16 %v1245, %v982
        %v1270 = vunpack.c.l.b16 %v1228
        %v1271 = vunpack.c.l.b16 %v1229
        %v1272 = vunpack.c.l.b16 %v1230
        %v1273 = vunpack.c.l.b16 %v1231
        %v1274 = vunpack.c.l.b16 %v1232
        %v1275 = vunpack.c.l.b16 %v1233
        %v1276 = vunpack.c.l.b16 %v1234
        %v1277 = vunpack.c.l.b16 %v1235
        %v1278 = vunpack.c.l.b16 %v1236
        %v1279 = vunpack.c.l.b16 %v1237
        %v1280 = vunpack.c.l.b16 %v1238
        %v1281 = vunpack.c.l.b16 %v1239
        %v1282 = vunpack.c.l.b16 %v1240
        %v1283 = vunpack.c.l.b16 %v1241
        %v1284 = vunpack.c.l.b16 %v1242
        %v1285 = vunpack.c.l.b16 %v1243
        %v1286 = vpack.c.b16 %v1271, %v1270
        %v1287 = vpack.c.b16 %v1273, %v1272
        %v1288 = vpack.c.b16 %v1275, %v1274
        %v1289 = vpack.c.b16 %v1277, %v1276
        %v1290 = vpack.c.b16 %v1279, %v1278
        %v1291 = vpack.c.b16 %v1281, %v1280
        %v1292 = vpack.c.b16 %v1283, %v1282
        %v1293 = vpack.c.b16 %v1285, %v1284
        %1302 = vmatpush.bf16.msra.mxu0 %v1293
        %1303 = vmatpush.bf16.msra.mxu0 %v1292
        %1304 = vmatpush.bf16.msra.mxu0 %v1291
        %1305 = vmatpush.bf16.msra.mxu0 %v1290
        %1306 = vmatpush.bf16.msra.mxu0 %v1289
        %1307 = vmatpush.bf16.msra.mxu0 %v1288
        %1308 = vmatpush.bf16.msra.mxu0 %v1287
        %1309 = vmatpush.bf16.msra.mxu0 %v1286
        %1310 = vmatmul.bf16.gmra.mxu0 %v1246
        %v1311 = vpop.f32.mrf.mxu0
        %v1312 = vadd.f32 0.0, %v1311
        %v1313 = vpop.f32.mrf.mxu0
        %v1314 = vadd.f32 0.0, %v1313
        %1315 = vmatmul.bf16.gmra.mxu0 %v1247
        %v1316 = vpop.f32.mrf.mxu0
        %v1317 = vadd.f32 0.0, %v1316
        %v1318 = vpop.f32.mrf.mxu0
        %v1319 = vadd.f32 0.0, %v1318
        %1320 = vmatmul.bf16.gmra.mxu0 %v1248
        %v1321 = vpop.f32.mrf.mxu0
        %v1322 = vadd.f32 0.0, %v1321
        %v1323 = vpop.f32.mrf.mxu0
        %v1324 = vadd.f32 0.0, %v1323
        %1325 = vmatmul.bf16.gmra.mxu0 %v1249
        %v1326 = vpop.f32.mrf.mxu0
        %v1327 = vadd.f32 0.0, %v1326
        %v1328 = vpop.f32.mrf.mxu0
        %v1329 = vadd.f32 0.0, %v1328
        %1330 = vdwg.mxu0
        %v1331 = vadd.f32 %v1220, %v1312
        %v1332 = vadd.f32 %v1221, %v1314
        %v1333 = vadd.f32 %v1222, %v1317
        %v1334 = vadd.f32 %v1223, %v1319
        %v1335 = vadd.f32 %v1224, %v1322
        %v1336 = vadd.f32 %v1225, %v1324
        %v1337 = vadd.f32 %v1226, %v1327
        %v1338 = vadd.f32 %v1227, %v1329
        %v1340 = vshrl.u32 %v723, 16
        %v1342 = vrot.slane %v1340, 4
        %v1343 = vshll.u32 %v723, 16
        %v1345 = vrot.slane %v1343, 5
        %v1346 = vor.u32 %v1342, %v1345
        %v1347 = vrot.slane %v1346, 4
        %v1349 = vshll.u32 %v724, 16
        %v1351 = vrot.slane %v1349, 5
        %v1352 = vsel %vm745, %v1347, %v1351
        %v1353 = vld [vmem:[#allocation2 + $0x100] sm:$0xf]
        %v1354 = vld [vmem:[#allocation2 + $0x104] sm:$0xf]
        %v1355 = vld [vmem:[#allocation2 + $0x108] sm:$0xf]
        %v1356 = vld [vmem:[#allocation2 + $0x10c] sm:$0xf]
        %v1357 = vld [vmem:[#allocation2 + $0x110] sm:$0xf]
        %v1358 = vld [vmem:[#allocation2 + $0x114] sm:$0xf]
        %v1359 = vld [vmem:[#allocation2 + $0x118] sm:$0xf]
        %v1360 = vld [vmem:[#allocation2 + $0x11c] sm:$0xf]
        %v1361 = vld [vmem:[#allocation2 + $0x120] sm:$0xf]
        %v1362 = vld [vmem:[#allocation2 + $0x124] sm:$0xf]
        %v1363 = vld [vmem:[#allocation2 + $0x128] sm:$0xf]
        %v1364 = vld [vmem:[#allocation2 + $0x12c] sm:$0xf]
        %v1365 = vld [vmem:[#allocation2 + $0x130] sm:$0xf]
        %v1366 = vld [vmem:[#allocation2 + $0x134] sm:$0xf]
        %v1367 = vld [vmem:[#allocation2 + $0x138] sm:$0xf]
        %v1368 = vld [vmem:[#allocation2 + $0x13c] sm:$0xf]
        %v1369 = vunpack.c.l.b16 %v1352
        %v1370 = vpack.c.b16 %v876, %v875
        %v1371 = vpack.c.b16 %v878, %v877
        %v1372 = vpack.c.b16 %v880, %v879
        %v1373 = vpack.c.b16 %v1369, %v881
        %v1394 = vunpack.c.l.b16 %v1353
        %v1395 = vunpack.c.l.b16 %v1354
        %v1396 = vunpack.c.l.b16 %v1355
        %v1397 = vunpack.c.l.b16 %v1356
        %v1398 = vunpack.c.l.b16 %v1357
        %v1399 = vunpack.c.l.b16 %v1358
        %v1400 = vunpack.c.l.b16 %v1359
        %v1401 = vunpack.c.l.b16 %v1360
        %v1402 = vunpack.c.l.b16 %v1361
        %v1403 = vunpack.c.l.b16 %v1362
        %v1404 = vunpack.c.l.b16 %v1363
        %v1405 = vunpack.c.l.b16 %v1364
        %v1406 = vunpack.c.l.b16 %v1365
        %v1407 = vunpack.c.l.b16 %v1366
        %v1408 = vunpack.c.l.b16 %v1367
        %v1409 = vunpack.c.l.b16 %v1368
        %v1410 = vpack.c.b16 %v1395, %v1394
        %v1411 = vpack.c.b16 %v1397, %v1396
        %v1412 = vpack.c.b16 %v1399, %v1398
        %v1413 = vpack.c.b16 %v1401, %v1400
        %v1414 = vpack.c.b16 %v1403, %v1402
        %v1415 = vpack.c.b16 %v1405, %v1404
        %v1416 = vpack.c.b16 %v1407, %v1406
        %v1417 = vpack.c.b16 %v1409, %v1408
        %1426 = vmatpush.bf16.msra.mxu0 %v1417
        %1427 = vmatpush.bf16.msra.mxu0 %v1416
        %1428 = vmatpush.bf16.msra.mxu0 %v1415
        %1429 = vmatpush.bf16.msra.mxu0 %v1414
        %1430 = vmatpush.bf16.msra.mxu0 %v1413
        %1431 = vmatpush.bf16.msra.mxu0 %v1412
        %1432 = vmatpush.bf16.msra.mxu0 %v1411
        %1433 = vmatpush.bf16.msra.mxu0 %v1410
        %1434 = vmatmul.bf16.gmra.mxu0 %v1370
        %v1435 = vpop.f32.mrf.mxu0
        %v1436 = vadd.f32 0.0, %v1435
        %v1437 = vpop.f32.mrf.mxu0
        %v1438 = vadd.f32 0.0, %v1437
        %1439 = vmatmul.bf16.gmra.mxu0 %v1371
        %v1440 = vpop.f32.mrf.mxu0
        %v1441 = vadd.f32 0.0, %v1440
        %v1442 = vpop.f32.mrf.mxu0
        %v1443 = vadd.f32 0.0, %v1442
        %1444 = vmatmul.bf16.gmra.mxu0 %v1372
        %v1445 = vpop.f32.mrf.mxu0
        %v1446 = vadd.f32 0.0, %v1445
        %v1447 = vpop.f32.mrf.mxu0
        %v1448 = vadd.f32 0.0, %v1447
        %1449 = vmatmul.bf16.gmra.mxu0 %v1373
        %v1450 = vpop.f32.mrf.mxu0
        %v1451 = vadd.f32 0.0, %v1450
        %v1452 = vpop.f32.mrf.mxu0
        %v1453 = vadd.f32 0.0, %v1452
        %1454 = vdwg.mxu0
        %v1455 = vadd.f32 %v1331, %v1436
        %v1456 = vadd.f32 %v1332, %v1438
        %v1457 = vadd.f32 %v1333, %v1441
        %v1458 = vadd.f32 %v1334, %v1443
        %v1459 = vadd.f32 %v1335, %v1446
        %v1460 = vadd.f32 %v1336, %v1448
        %v1461 = vadd.f32 %v1337, %v1451
        %v1462 = vadd.f32 %v1338, %v1453
        %v1464 = vrot.slane %v723, 5
        %v1465 = vrot.slane %v1464, 4
        %v1466 = vrot.slane %v724, 5
        %v1467 = vsel %vm1078, %v1465, %v1466
        %v1468 = vld [vmem:[#allocation2 + $0x140] sm:$0xf]
        %v1469 = vld [vmem:[#allocation2 + $0x144] sm:$0xf]
        %v1470 = vld [vmem:[#allocation2 + $0x148] sm:$0xf]
        %v1471 = vld [vmem:[#allocation2 + $0x14c] sm:$0xf]
        %v1472 = vld [vmem:[#allocation2 + $0x150] sm:$0xf]
        %v1473 = vld [vmem:[#allocation2 + $0x154] sm:$0xf]
        %v1474 = vld [vmem:[#allocation2 + $0x158] sm:$0xf]
        %v1475 = vld [vmem:[#allocation2 + $0x15c] sm:$0xf]
        %v1476 = vld [vmem:[#allocation2 + $0x160] sm:$0xf]
        %v1477 = vld [vmem:[#allocation2 + $0x164] sm:$0xf]
        %v1478 = vld [vmem:[#allocation2 + $0x168] sm:$0xf]
        %v1479 = vld [vmem:[#allocation2 + $0x16c] sm:$0xf]
        %v1480 = vld [vmem:[#allocation2 + $0x170] sm:$0xf]
        %v1481 = vld [vmem:[#allocation2 + $0x174] sm:$0xf]
        %v1482 = vld [vmem:[#allocation2 + $0x178] sm:$0xf]
        %v1483 = vld [vmem:[#allocation2 + $0x17c] sm:$0xf]
        %v1484 = vunpack.c.l.b16 %v1467
        %v1485 = vpack.c.b16 %v1129, %v1128
        %v1486 = vpack.c.b16 %v1131, %v1130
        %v1487 = vpack.c.b16 %v1133, %v1132
        %v1488 = vpack.c.b16 %v1484, %v1134
        %v1509 = vunpack.c.l.b16 %v1468
        %v1510 = vunpack.c.l.b16 %v1469
        %v1511 = vunpack.c.l.b16 %v1470
        %v1512 = vunpack.c.l.b16 %v1471
        %v1513 = vunpack.c.l.b16 %v1472
        %v1514 = vunpack.c.l.b16 %v1473
        %v1515 = vunpack.c.l.b16 %v1474
        %v1516 = vunpack.c.l.b16 %v1475
        %v1517 = vunpack.c.l.b16 %v1476
        %v1518 = vunpack.c.l.b16 %v1477
        %v1519 = vunpack.c.l.b16 %v1478
        %v1520 = vunpack.c.l.b16 %v1479
        %v1521 = vunpack.c.l.b16 %v1480
        %v1522 = vunpack.c.l.b16 %v1481
        %v1523 = vunpack.c.l.b16 %v1482
        %v1524 = vunpack.c.l.b16 %v1483
        %v1525 = vpack.c.b16 %v1510, %v1509
        %v1526 = vpack.c.b16 %v1512, %v1511
        %v1527 = vpack.c.b16 %v1514, %v1513
        %v1528 = vpack.c.b16 %v1516, %v1515
        %v1529 = vpack.c.b16 %v1518, %v1517
        %v1530 = vpack.c.b16 %v1520, %v1519
        %v1531 = vpack.c.b16 %v1522, %v1521
        %v1532 = vpack.c.b16 %v1524, %v1523
        %1541 = vmatpush.bf16.msra.mxu0 %v1532
        %1542 = vmatpush.bf16.msra.mxu0 %v1531
        %1543 = vmatpush.bf16.msra.mxu0 %v1530
        %1544 = vmatpush.bf16.msra.mxu0 %v1529
        %1545 = vmatpush.bf16.msra.mxu0 %v1528
        %1546 = vmatpush.bf16.msra.mxu0 %v1527
        %1547 = vmatpush.bf16.msra.mxu0 %v1526
        %1548 = vmatpush.bf16.msra.mxu0 %v1525
        %1549 = vmatmul.bf16.gmra.mxu0 %v1485
        %v1550 = vpop.f32.mrf.mxu0
        %v1551 = vadd.f32 0.0, %v1550
        %v1552 = vpop.f32.mrf.mxu0
        %v1553 = vadd.f32 0.0, %v1552
        %1554 = vmatmul.bf16.gmra.mxu0 %v1486
        %v1555 = vpop.f32.mrf.mxu0
        %v1556 = vadd.f32 0.0, %v1555
        %v1557 = vpop.f32.mrf.mxu0
        %v1558 = vadd.f32 0.0, %v1557
        %1559 = vmatmul.bf16.gmra.mxu0 %v1487
        %v1560 = vpop.f32.mrf.mxu0
        %v1561 = vadd.f32 0.0, %v1560
        %v1562 = vpop.f32.mrf.mxu0
        %v1563 = vadd.f32 0.0, %v1562
        %1564 = vmatmul.bf16.gmra.mxu0 %v1488
        %v1565 = vpop.f32.mrf.mxu0
        %v1566 = vadd.f32 0.0, %v1565
        %v1567 = vpop.f32.mrf.mxu0
        %v1568 = vadd.f32 0.0, %v1567
        %1569 = vdwg.mxu0
        %v1570 = vadd.f32 %v1455, %v1551
        %v1571 = vadd.f32 %v1456, %v1553
        %v1572 = vadd.f32 %v1457, %v1556
        %v1573 = vadd.f32 %v1458, %v1558
        %v1574 = vadd.f32 %v1459, %v1561
        %v1575 = vadd.f32 %v1460, %v1563
        %v1576 = vadd.f32 %v1461, %v1566
        %v1577 = vadd.f32 %v1462, %v1568
        %v1578 = vld [vmem:[#allocation2 + $0x180] sm:$0xf]
        %v1579 = vld [vmem:[#allocation2 + $0x184] sm:$0xf]
        %v1580 = vld [vmem:[#allocation2 + $0x188] sm:$0xf]
        %v1581 = vld [vmem:[#allocation2 + $0x18c] sm:$0xf]
        %v1582 = vld [vmem:[#allocation2 + $0x190] sm:$0xf]
        %v1583 = vld [vmem:[#allocation2 + $0x194] sm:$0xf]
        %v1584 = vld [vmem:[#allocation2 + $0x198] sm:$0xf]
        %v1585 = vld [vmem:[#allocation2 + $0x19c] sm:$0xf]
        %v1586 = vld [vmem:[#allocation2 + $0x1a0] sm:$0xf]
        %v1587 = vld [vmem:[#allocation2 + $0x1a4] sm:$0xf]
        %v1588 = vld [vmem:[#allocation2 + $0x1a8] sm:$0xf]
        %v1589 = vld [vmem:[#allocation2 + $0x1ac] sm:$0xf]
        %v1590 = vld [vmem:[#allocation2 + $0x1b0] sm:$0xf]
        %v1591 = vld [vmem:[#allocation2 + $0x1b4] sm:$0xf]
        %v1592 = vld [vmem:[#allocation2 + $0x1b8] sm:$0xf]
        %v1593 = vld [vmem:[#allocation2 + $0x1bc] sm:$0xf]
        %v1595 = vunpack.c.l.b16 %v725
        %v1596 = vpack.c.b16 %v1595, %v1245
        %v1614 = vunpack.c.l.b16 %v1578
        %v1615 = vunpack.c.l.b16 %v1579
        %v1616 = vunpack.c.l.b16 %v1580
        %v1617 = vunpack.c.l.b16 %v1581
        %v1618 = vunpack.c.l.b16 %v1582
        %v1619 = vunpack.c.l.b16 %v1583
        %v1620 = vunpack.c.l.b16 %v1584
        %v1621 = vunpack.c.l.b16 %v1585
        %v1622 = vunpack.c.l.b16 %v1586
        %v1623 = vunpack.c.l.b16 %v1587
        %v1624 = vunpack.c.l.b16 %v1588
        %v1625 = vunpack.c.l.b16 %v1589
        %v1626 = vunpack.c.l.b16 %v1590
        %v1627 = vunpack.c.l.b16 %v1591
        %v1628 = vunpack.c.l.b16 %v1592
        %v1629 = vunpack.c.l.b16 %v1593
        %v1630 = vpack.c.b16 %v1615, %v1614
        %v1631 = vpack.c.b16 %v1617, %v1616
        %v1632 = vpack.c.b16 %v1619, %v1618
        %v1633 = vpack.c.b16 %v1621, %v1620
        %v1634 = vpack.c.b16 %v1623, %v1622
        %v1635 = vpack.c.b16 %v1625, %v1624
        %v1636 = vpack.c.b16 %v1627, %v1626
        %v1637 = vpack.c.b16 %v1629, %v1628
        %1646 = vmatpush.bf16.msra.mxu0 %v1637
        %1647 = vmatpush.bf16.msra.mxu0 %v1636
        %1648 = vmatpush.bf16.msra.mxu0 %v1635
        %1649 = vmatpush.bf16.msra.mxu0 %v1634
        %1650 = vmatpush.bf16.msra.mxu0 %v1633
        %1651 = vmatpush.bf16.msra.mxu0 %v1632
        %1652 = vmatpush.bf16.msra.mxu0 %v1631
        %1653 = vmatpush.bf16.msra.mxu0 %v1630
        %1654 = vmatmul.bf16.gmra.mxu0 %v984
        %v1655 = vpop.f32.mrf.mxu0
        %v1656 = vadd.f32 0.0, %v1655
        %v1657 = vpop.f32.mrf.mxu0
        %v1658 = vadd.f32 0.0, %v1657
        %1659 = vmatmul.bf16.gmra.mxu0 %v985
        %v1660 = vpop.f32.mrf.mxu0
        %v1661 = vadd.f32 0.0, %v1660
        %v1662 = vpop.f32.mrf.mxu0
        %v1663 = vadd.f32 0.0, %v1662
        %1664 = vmatmul.bf16.gmra.mxu0 %v986
        %v1665 = vpop.f32.mrf.mxu0
        %v1666 = vadd.f32 0.0, %v1665
        %v1667 = vpop.f32.mrf.mxu0
        %v1668 = vadd.f32 0.0, %v1667
        %1669 = vmatmul.bf16.gmra.mxu0 %v1596
        %v1670 = vpop.f32.mrf.mxu0
        %v1671 = vadd.f32 0.0, %v1670
        %v1672 = vpop.f32.mrf.mxu0
        %v1673 = vadd.f32 0.0, %v1672
        %1674 = vdwg.mxu0
        %v1675 = vadd.f32 %v1570, %v1656
        %v1676 = vadd.f32 %v1571, %v1658
        %v1677 = vadd.f32 %v1572, %v1661
        %v1678 = vadd.f32 %v1573, %v1663
        %v1679 = vadd.f32 %v1574, %v1666
        %v1680 = vadd.f32 %v1575, %v1668
        %v1681 = vadd.f32 %v1576, %v1671
        %v1682 = vadd.f32 %v1577, %v1673
        %v1684 = vshrl.u32 %v725, 16
        %v1686 = vrot.slane %v1684, 4
        %v1687 = vshll.u32 %v725, 16
        %v1689 = vrot.slane %v1687, 5
        %v1690 = vor.u32 %v1686, %v1689
        %v1691 = vrot.slane %v1690, 4
        %v1693 = vshll.u32 %v726, 16
        %v1695 = vrot.slane %v1693, 5
        %v1696 = vsel %vm745, %v1691, %v1695
        %v1697 = vld [vmem:[#allocation2 + $0x1c0] sm:$0xf]
        %v1698 = vld [vmem:[#allocation2 + $0x1c4] sm:$0xf]
        %v1699 = vld [vmem:[#allocation2 + $0x1c8] sm:$0xf]
        %v1700 = vld [vmem:[#allocation2 + $0x1cc] sm:$0xf]
        %v1701 = vld [vmem:[#allocation2 + $0x1d0] sm:$0xf]
        %v1702 = vld [vmem:[#allocation2 + $0x1d4] sm:$0xf]
        %v1703 = vld [vmem:[#allocation2 + $0x1d8] sm:$0xf]
        %v1704 = vld [vmem:[#allocation2 + $0x1dc] sm:$0xf]
        %v1705 = vld [vmem:[#allocation2 + $0x1e0] sm:$0xf]
        %v1706 = vld [vmem:[#allocation2 + $0x1e4] sm:$0xf]
        %v1707 = vld [vmem:[#allocation2 + $0x1e8] sm:$0xf]
        %v1708 = vld [vmem:[#allocation2 + $0x1ec] sm:$0xf]
        %v1709 = vld [vmem:[#allocation2 + $0x1f0] sm:$0xf]
        %v1710 = vld [vmem:[#allocation2 + $0x1f4] sm:$0xf]
        %v1711 = vld [vmem:[#allocation2 + $0x1f8] sm:$0xf]
        %v1712 = vld [vmem:[#allocation2 + $0x1fc] sm:$0xf]
        %v1713 = vunpack.c.l.b16 %v1696
        %v1714 = vpack.c.b16 %v1713, %v1369
        %v1732 = vunpack.c.l.b16 %v1697
        %v1733 = vunpack.c.l.b16 %v1698
        %v1734 = vunpack.c.l.b16 %v1699
        %v1735 = vunpack.c.l.b16 %v1700
        %v1736 = vunpack.c.l.b16 %v1701
        %v1737 = vunpack.c.l.b16 %v1702
        %v1738 = vunpack.c.l.b16 %v1703
        %v1739 = vunpack.c.l.b16 %v1704
        %v1740 = vunpack.c.l.b16 %v1705
        %v1741 = vunpack.c.l.b16 %v1706
        %v1742 = vunpack.c.l.b16 %v1707
        %v1743 = vunpack.c.l.b16 %v1708
        %v1744 = vunpack.c.l.b16 %v1709
        %v1745 = vunpack.c.l.b16 %v1710
        %v1746 = vunpack.c.l.b16 %v1711
        %v1747 = vunpack.c.l.b16 %v1712
        %v1748 = vpack.c.b16 %v1733, %v1732
        %v1749 = vpack.c.b16 %v1735, %v1734
        %v1750 = vpack.c.b16 %v1737, %v1736
        %v1751 = vpack.c.b16 %v1739, %v1738
        %v1752 = vpack.c.b16 %v1741, %v1740
        %v1753 = vpack.c.b16 %v1743, %v1742
        %v1754 = vpack.c.b16 %v1745, %v1744
        %v1755 = vpack.c.b16 %v1747, %v1746
        %1764 = vmatpush.bf16.msra.mxu0 %v1755
        %1765 = vmatpush.bf16.msra.mxu0 %v1754
        %1766 = vmatpush.bf16.msra.mxu0 %v1753
        %1767 = vmatpush.bf16.msra.mxu0 %v1752
        %1768 = vmatpush.bf16.msra.mxu0 %v1751
        %1769 = vmatpush.bf16.msra.mxu0 %v1750
        %1770 = vmatpush.bf16.msra.mxu0 %v1749
        %1771 = vmatpush.bf16.msra.mxu0 %v1748
        %1772 = vmatmul.bf16.gmra.mxu0 %v883
        %v1773 = vpop.f32.mrf.mxu0
        %v1774 = vadd.f32 0.0, %v1773
        %v1775 = vpop.f32.mrf.mxu0
        %v1776 = vadd.f32 0.0, %v1775
        %1777 = vmatmul.bf16.gmra.mxu0 %v884
        %v1778 = vpop.f32.mrf.mxu0
        %v1779 = vadd.f32 0.0, %v1778
        %v1780 = vpop.f32.mrf.mxu0
        %v1781 = vadd.f32 0.0, %v1780
        %1782 = vmatmul.bf16.gmra.mxu0 %v885
        %v1783 = vpop.f32.mrf.mxu0
        %v1784 = vadd.f32 0.0, %v1783
        %v1785 = vpop.f32.mrf.mxu0
        %v1786 = vadd.f32 0.0, %v1785
        %1787 = vmatmul.bf16.gmra.mxu0 %v1714
        %v1788 = vpop.f32.mrf.mxu0
        %v1789 = vadd.f32 0.0, %v1788
        %v1790 = vpop.f32.mrf.mxu0
        %v1791 = vadd.f32 0.0, %v1790
        %1792 = vdwg.mxu0
        %v1793 = vadd.f32 %v1675, %v1774
        %v1794 = vadd.f32 %v1676, %v1776
        %v1795 = vadd.f32 %v1677, %v1779
        %v1796 = vadd.f32 %v1678, %v1781
        %v1797 = vadd.f32 %v1679, %v1784
        %v1798 = vadd.f32 %v1680, %v1786
        %v1799 = vadd.f32 %v1681, %v1789
        %v1800 = vadd.f32 %v1682, %v1791
        %v1802 = vrot.slane %v725, 5
        %v1803 = vrot.slane %v1802, 4
        %v1804 = vrot.slane %v726, 5
        %v1805 = vsel %vm1078, %v1803, %v1804
        %v1806 = vld [vmem:[#allocation2 + $0x200] sm:$0xf]
        %v1807 = vld [vmem:[#allocation2 + $0x204] sm:$0xf]
        %v1808 = vld [vmem:[#allocation2 + $0x208] sm:$0xf]
        %v1809 = vld [vmem:[#allocation2 + $0x20c] sm:$0xf]
        %v1810 = vld [vmem:[#allocation2 + $0x210] sm:$0xf]
        %v1811 = vld [vmem:[#allocation2 + $0x214] sm:$0xf]
        %v1812 = vld [vmem:[#allocation2 + $0x218] sm:$0xf]
        %v1813 = vld [vmem:[#allocation2 + $0x21c] sm:$0xf]
        %v1814 = vld [vmem:[#allocation2 + $0x220] sm:$0xf]
        %v1815 = vld [vmem:[#allocation2 + $0x224] sm:$0xf]
        %v1816 = vld [vmem:[#allocation2 + $0x228] sm:$0xf]
        %v1817 = vld [vmem:[#allocation2 + $0x22c] sm:$0xf]
        %v1818 = vld [vmem:[#allocation2 + $0x230] sm:$0xf]
        %v1819 = vld [vmem:[#allocation2 + $0x234] sm:$0xf]
        %v1820 = vld [vmem:[#allocation2 + $0x238] sm:$0xf]
        %v1821 = vld [vmem:[#allocation2 + $0x23c] sm:$0xf]
        %v1822 = vunpack.c.l.b16 %v1805
        %v1823 = vpack.c.b16 %v1822, %v1484
        %v1841 = vunpack.c.l.b16 %v1806
        %v1842 = vunpack.c.l.b16 %v1807
        %v1843 = vunpack.c.l.b16 %v1808
        %v1844 = vunpack.c.l.b16 %v1809
        %v1845 = vunpack.c.l.b16 %v1810
        %v1846 = vunpack.c.l.b16 %v1811
        %v1847 = vunpack.c.l.b16 %v1812
        %v1848 = vunpack.c.l.b16 %v1813
        %v1849 = vunpack.c.l.b16 %v1814
        %v1850 = vunpack.c.l.b16 %v1815
        %v1851 = vunpack.c.l.b16 %v1816
        %v1852 = vunpack.c.l.b16 %v1817
        %v1853 = vunpack.c.l.b16 %v1818
        %v1854 = vunpack.c.l.b16 %v1819
        %v1855 = vunpack.c.l.b16 %v1820
        %v1856 = vunpack.c.l.b16 %v1821
        %v1857 = vpack.c.b16 %v1842, %v1841
        %v1858 = vpack.c.b16 %v1844, %v1843
        %v1859 = vpack.c.b16 %v1846, %v1845
        %v1860 = vpack.c.b16 %v1848, %v1847
        %v1861 = vpack.c.b16 %v1850, %v1849
        %v1862 = vpack.c.b16 %v1852, %v1851
        %v1863 = vpack.c.b16 %v1854, %v1853
        %v1864 = vpack.c.b16 %v1856, %v1855
        %1873 = vmatpush.bf16.msra.mxu0 %v1864
        %1874 = vmatpush.bf16.msra.mxu0 %v1863
        %1875 = vmatpush.bf16.msra.mxu0 %v1862
        %1876 = vmatpush.bf16.msra.mxu0 %v1861
        %1877 = vmatpush.bf16.msra.mxu0 %v1860
        %1878 = vmatpush.bf16.msra.mxu0 %v1859
        %1879 = vmatpush.bf16.msra.mxu0 %v1858
        %1880 = vmatpush.bf16.msra.mxu0 %v1857
        %1881 = vmatmul.bf16.gmra.mxu0 %v1136
        %v1882 = vpop.f32.mrf.mxu0
        %v1883 = vadd.f32 0.0, %v1882
        %v1884 = vpop.f32.mrf.mxu0
        %v1885 = vadd.f32 0.0, %v1884
        %1886 = vmatmul.bf16.gmra.mxu0 %v1137
        %v1887 = vpop.f32.mrf.mxu0
        %v1888 = vadd.f32 0.0, %v1887
        %v1889 = vpop.f32.mrf.mxu0
        %v1890 = vadd.f32 0.0, %v1889
        %1891 = vmatmul.bf16.gmra.mxu0 %v1138
        %v1892 = vpop.f32.mrf.mxu0
        %v1893 = vadd.f32 0.0, %v1892
        %v1894 = vpop.f32.mrf.mxu0
        %v1895 = vadd.f32 0.0, %v1894
        %1896 = vmatmul.bf16.gmra.mxu0 %v1823
        %v1897 = vpop.f32.mrf.mxu0
        %v1898 = vadd.f32 0.0, %v1897
        %v1899 = vpop.f32.mrf.mxu0
        %v1900 = vadd.f32 0.0, %v1899
        %1901 = vdwg.mxu0
        %v1902 = vadd.f32 %v1793, %v1883
        %v1903 = vadd.f32 %v1794, %v1885
        %v1904 = vadd.f32 %v1795, %v1888
        %v1905 = vadd.f32 %v1796, %v1890
        %v1906 = vadd.f32 %v1797, %v1893
        %v1907 = vadd.f32 %v1798, %v1895
        %v1908 = vadd.f32 %v1799, %v1898
        %v1909 = vadd.f32 %v1800, %v1900
        %v1910 = vld [vmem:[%s5] sm:$0x1]
        %v1912 = vperm.slane %v1910, 0
        %vm1914 = vcmp.gt.f32.partialorder %v1902, %v1912
        %vm1915 = vcmp.gt.f32.partialorder %v1903, %v1912
        %vm1916 = vcmp.gt.f32.partialorder %v1904, %v1912
        %vm1917 = vcmp.gt.f32.partialorder %v1905, %v1912
        %vm1918 = vcmp.gt.f32.partialorder %v1906, %v1912
        %vm1919 = vcmp.gt.f32.partialorder %v1907, %v1912
        %vm1920 = vcmp.gt.f32.partialorder %v1908, %v1912
        %vm1921 = vcmp.gt.f32.partialorder %v1909, %v1912
        %v1922 = vsel %vm1914, 1.0, 0.0
        %v1923 = vsel %vm1915, 1.0, 0.0
        %v1924 = vsel %vm1916, 1.0, 0.0
        %v1925 = vsel %vm1917, 1.0, 0.0
        %v1926 = vsel %vm1918, 1.0, 0.0
        %v1927 = vsel %vm1919, 1.0, 0.0
        %v1928 = vsel %vm1920, 1.0, 0.0
        %v1929 = vsel %vm1921, 1.0, 0.0
        %v1930 = vpack.c.bf16 %v1923, %v1922
        %v1931 = vpack.c.bf16 %v1925, %v1924
        %v1932 = vpack.c.bf16 %v1927, %v1926
        %v1933 = vpack.c.bf16 %v1929, %v1928
        %v1934 = vld [vmem:[%s6] sm:$0xf]
        %v1935 = vld [vmem:[%s6 + $0x4] sm:$0xf]
        %v1936 = vld [vmem:[%s6 + $0x8] sm:$0xf]
        %v1937 = vld [vmem:[%s6 + $0xc] sm:$0xf]
        %v1938 = vld [vmem:[%s6 + $0x10] sm:$0xf]
        %v1939 = vld [vmem:[%s6 + $0x14] sm:$0xf]
        %v1940 = vld [vmem:[%s6 + $0x18] sm:$0xf]
        %v1941 = vld [vmem:[%s6 + $0x1c] sm:$0xf]
        %v1942 = vld [vmem:[%s6 + $0x20] sm:$0xf]
        %v1943 = vld [vmem:[%s6 + $0x24] sm:$0xf]
        %v1944 = vld [vmem:[%s6 + $0x28] sm:$0xf]
        %v1945 = vld [vmem:[%s6 + $0x2c] sm:$0xf]
        %v1946 = vld [vmem:[%s6 + $0x30] sm:$0xf]
        %v1947 = vld [vmem:[%s6 + $0x34] sm:$0xf]
        %v1948 = vld [vmem:[%s6 + $0x38] sm:$0xf]
        %v1949 = vld [vmem:[%s6 + $0x3c] sm:$0xf]
        %v1966 = vunpack.c.l.b16 %v1934
        %v1967 = vunpack.c.l.b16 %v1935
        %v1968 = vunpack.c.l.b16 %v1936
        %v1969 = vunpack.c.l.b16 %v1937
        %v1970 = vunpack.c.l.b16 %v1938
        %v1971 = vunpack.c.l.b16 %v1939
        %v1972 = vunpack.c.l.b16 %v1940
        %v1973 = vunpack.c.l.b16 %v1941
        %v1974 = vunpack.c.l.b16 %v1942
        %v1975 = vunpack.c.l.b16 %v1943
        %v1976 = vunpack.c.l.b16 %v1944
        %v1977 = vunpack.c.l.b16 %v1945
        %v1978 = vunpack.c.l.b16 %v1946
        %v1979 = vunpack.c.l.b16 %v1947
        %v1980 = vunpack.c.l.b16 %v1948
        %v1981 = vunpack.c.l.b16 %v1949
        %v1982 = vpack.c.b16 %v1967, %v1966
        %v1983 = vpack.c.b16 %v1969, %v1968
        %v1984 = vpack.c.b16 %v1971, %v1970
        %v1985 = vpack.c.b16 %v1973, %v1972
        %v1986 = vpack.c.b16 %v1975, %v1974
        %v1987 = vpack.c.b16 %v1977, %v1976
        %v1988 = vpack.c.b16 %v1979, %v1978
        %v1989 = vpack.c.b16 %v1981, %v1980
        %1998 = vmatpush.bf16.msra.mxu0 %v1989
        %1999 = vmatpush.bf16.msra.mxu0 %v1988
        %2000 = vmatpush.bf16.msra.mxu0 %v1987
        %2001 = vmatpush.bf16.msra.mxu0 %v1986
        %2002 = vmatpush.bf16.msra.mxu0 %v1985
        %2003 = vmatpush.bf16.msra.mxu0 %v1984
        %2004 = vmatpush.bf16.msra.mxu0 %v1983
        %2005 = vmatpush.bf16.msra.mxu0 %v1982
        %2006 = vmatmul.bf16.gmra.mxu0 %v1930
        %v2007 = vpop.f32.mrf.mxu0
        %v2008 = vadd.f32 0.0, %v2007
        %v2009 = vpop.f32.mrf.mxu0
        %v2010 = vadd.f32 0.0, %v2009
        %2011 = vmatmul.bf16.gmra.mxu0 %v1931
        %v2012 = vpop.f32.mrf.mxu0
        %v2013 = vadd.f32 0.0, %v2012
        %v2014 = vpop.f32.mrf.mxu0
        %v2015 = vadd.f32 0.0, %v2014
        %2016 = vmatmul.bf16.gmra.mxu0 %v1932
        %v2017 = vpop.f32.mrf.mxu0
        %v2018 = vadd.f32 0.0, %v2017
        %v2019 = vpop.f32.mrf.mxu0
        %v2020 = vadd.f32 0.0, %v2019
        %2021 = vmatmul.bf16.gmra.mxu0 %v1933
        %v2022 = vpop.f32.mrf.mxu0
        %v2023 = vadd.f32 0.0, %v2022
        %v2024 = vpop.f32.mrf.mxu0
        %v2025 = vadd.f32 0.0, %v2024
        %2026 = vdwg.mxu0
        %vm2043 = vcmask 1046528
        %v2044 = vrot.slane %v352, 1
        %v2045 = vrot.slane %v353, 1
        %v2046 = vsel %vm2043, %v2044, %v2045
        %v2047 = vrot.slane %v354, 1
        %v2048 = vrot.slane %v355, 1
        %v2049 = vsel %vm2043, %v2047, %v2048
        %v2050 = vrot.slane %v356, 1
        %v2051 = vrot.slane %v357, 1
        %v2052 = vsel %vm2043, %v2050, %v2051
        %v2053 = vrot.slane %v358, 1
        %v2054 = vrot.slane %v359, 1
        %v2055 = vsel %vm2043, %v2053, %v2054
        %v2056 = vrot.slane %v360, 1
        %v2057 = vrot.slane %v361, 1
        %v2058 = vsel %vm2043, %v2056, %v2057
        %v2059 = vrot.slane %v362, 1
        %v2060 = vrot.slane %v363, 1
        %v2061 = vsel %vm2043, %v2059, %v2060
        %v2062 = vrot.slane %v364, 1
        %v2063 = vrot.slane %v365, 1
        %v2064 = vsel %vm2043, %v2062, %v2063
        %v2065 = vrot.slane %v366, 1
        %v2066 = vrot.slane %v367, 1
        %v2067 = vsel %vm2043, %v2065, %v2066
        %v2076 = vld [vmem:[%s7] sm:$0x1]
        %v2078 = vperm.slane %v2076, 0
        %v2080 = vmul.f32 %v2008, %v2078
        %v2081 = vmul.f32 %v2010, %v2078
        %v2082 = vmul.f32 %v2013, %v2078
        %v2083 = vmul.f32 %v2015, %v2078
        %v2084 = vmul.f32 %v2018, %v2078
        %v2085 = vmul.f32 %v2020, %v2078
        %v2086 = vmul.f32 %v2023, %v2078
        %v2087 = vmul.f32 %v2025, %v2078
        %v2088 = vadd.f32 %v2080, %v2046
        %v2089 = vadd.f32 %v2081, %v2049
        %v2090 = vadd.f32 %v2082, %v2052
        %v2091 = vadd.f32 %v2083, %v2055
        %v2092 = vadd.f32 %v2084, %v2058
        %v2093 = vadd.f32 %v2085, %v2061
        %v2094 = vadd.f32 %v2086, %v2064
        %v2095 = vadd.f32 %v2087, %v2067
        %v2096 = vld [vmem:[%s8] sm:$0x1]
        %v2098 = vperm.slane %v2096, 0
        %vm2100 = vcmp.gt.f32.partialorder %v2088, %v2098
        %vm2101 = vcmp.gt.f32.partialorder %v2089, %v2098
        %vm2102 = vcmp.gt.f32.partialorder %v2090, %v2098
        %vm2103 = vcmp.gt.f32.partialorder %v2091, %v2098
        %vm2104 = vcmp.gt.f32.partialorder %v2092, %v2098
        %vm2105 = vcmp.gt.f32.partialorder %v2093, %v2098
        %vm2106 = vcmp.gt.f32.partialorder %v2094, %v2098
        %vm2107 = vcmp.gt.f32.partialorder %v2095, %v2098
        %v2108 = vsel %vm2100, 1.0, 0.0
        %v2109 = vsel %vm2101, 1.0, 0.0
        %v2110 = vsel %vm2102, 1.0, 0.0
        %v2111 = vsel %vm2103, 1.0, 0.0
        %v2112 = vsel %vm2104, 1.0, 0.0
        %v2113 = vsel %vm2105, 1.0, 0.0
        %v2114 = vsel %vm2106, 1.0, 0.0
        %v2115 = vsel %vm2107, 1.0, 0.0
        %2116 = vst [vmem:[%s349] sm:$0xff] %v2108
        %2117 = vst [vmem:[%s349 + $0x8] sm:$0xff] %v2109
        %2118 = vst [vmem:[%s349 + $0x10] sm:$0xff] %v2110
        %2119 = vst [vmem:[%s349 + $0x18] sm:$0xff] %v2111
        %2120 = vst [vmem:[%s349 + $0x20] sm:$0xff] %v2112
        %2121 = vst [vmem:[%s349 + $0x28] sm:$0xff] %v2113
        %2122 = vst [vmem:[%s349 + $0x30] sm:$0xff] %v2114
        %2123 = vst [vmem:[%s349 + $0x38] sm:$0xff] %v2115
        %p2124 = scmp.lt.s32.totalorder %s21, 1
        %s2125 = scalar_select %p2124, %s21, 1
        %s2126 = smul.addr %s2125, 8
        %s2127 = smul.addr %s2126, 8
        %s2128 = scalar_lea.vmem %s9, %s2127
        // Predicated region
        $region61: #{_lambda_.1} parent=55 // pred_check
          %p2129 = pneg %p233
        $region62: #{_lambda_.1} parent=55 // pred_check_branch
          %2131 = sbr.rel (%p2129) target = $region64
        $region63: #{_lambda_.1} parent=55 // pred_region
          _
        $region64: #{_lambda_.1} parent=55 // pred_fallthru
          _
      $region56: #{_lambda_.1} parent=5 // pred_fallthru
        _
      %p2132 = scmp.le.s32.totalorder 2, %s16
      // Predicated region
      $region65: #{_lambda_.1} parent=5 // pred_check
        %p2133 = pneg %p2132
      $region66: #{_lambda_.1} parent=5 // pred_check_branch
        %2135 = sbr.rel (%p2133) target = $region68
      $region67: #{_lambda_.1} parent=5 // pred_region
        %s2136 = ssub.s32 %s16, 2
        // Predicated region
        $region69: #{_lambda_.1} parent=67 // pred_check
          %p2137 = pneg %p239
        $region70: #{_lambda_.1} parent=67 // pred_check_branch
          %2139 = sbr.rel (%p2137) target = $region72
        $region71: #{_lambda_.1} parent=67 // pred_region
          %p2140 = scmp.lt.s32.totalorder %s22, 1
          %s2141 = scalar_select %p2140, %s22, 1
          %s2142 = smul.addr %s2141, 8
          %s2143 = smul.addr %s2142, 8
          %s2144 = scalar_lea.vmem %s9, %s2143
        $region72: #{_lambda_.1} parent=67 // pred_fallthru
          _
      $region68: #{_lambda_.1} parent=5 // pred_fallthru
        _
    $region6: #{_lambda_.1} parent=1 // loop_footer
      %s20 = sadd.s32 1, %s16
    $region7: #{_lambda_.1} parent=1 // loop_footer_branch
      %15 = sbr.rel target = $region3
    $region8: #{_lambda_.1} parent=1 // loop_exit
      _
    %2145 = vsyncpa [#allocation3], 1
    %s2146 = scalar_lea.sflag [#allocation3], 1
    %2147 = vsyncpa %s2146, 1

</llo_original>
